<compile_context>
chip_gen: v7x
topology: tpu7x:2x2x1
jax: 0.10.0
libtpu: 0.0.40
codegen_flags: <defaults>
</compile_context>

<pallas_src>
import jax
import jax.numpy as jnp
from jax.experimental import pallas as pl
from jax.experimental.pallas import tpu as pltpu

# RLlib's FLOAT_MIN == torch.finfo(torch.float32).min
FLOAT_MIN = float(jnp.finfo(jnp.float32).min)


def _round_up(x, m):
    return (x + m - 1) // m * m


def _tensorcores_per_chip():
    """2 on v7x (two TensorCores per chip), else 1.  Only affects tiling choice."""
    try:
        kind = jax.devices()[0].device_kind.lower()
    except Exception:
        return 1
    return 2 if ("v7" in kind or "7x" in kind or "tpu7" in kind) else 1


def _select_task_kernel(
    state_ref,        # [TB, S]   f32 (or bf16)
    nodep_ref,        # [TB, 4]   f32
    mask_ref,         # [TB, N]   f32  (raw, un-padded)
    w1_ref, b1_ref,   # [S, F1] bf16, [1, F1] f32
    w2_ref, b2_ref,   # [F1, F2] bf16, [1, F2] f32
    w3a_ref,          # [F2, N] bf16   (fc3 rows acting on h2)
    w3b_ref,          # [4,  N] f32    (fc3 rows acting on node_properties)
    b3_ref,           # [1,  N] f32
    wv_ref, bv_ref,   # [1,  N] f32, [1, 1] f32  (value branch)
    masked_ref,       # [TB, N] f32  -> fc3(..) + inf_mask
    feat_ref,         # [TB, N] f32  -> self._features
    val_ref,          # [TB, 1] f32  -> value_function()
):
    # fc1 + ReLU (bf16 MXU operands, f32 accumulate, f32 VPU epilogue)
    x = state_ref[...]
    if x.dtype != jnp.bfloat16:
        x = x.astype(jnp.bfloat16)
    h1 = jnp.dot(x, w1_ref[...], preferred_element_type=jnp.float32) + b1_ref[...]
    h1 = jnp.maximum(h1, 0.0)

    # fc2 + ReLU
    h2 = jnp.dot(h1.astype(jnp.bfloat16), w2_ref[...],
                 preferred_element_type=jnp.float32) + b2_ref[...]
    h2 = jnp.maximum(h2, 0.0)

    # fc3 on concat([h2, node_properties], axis=1) — split-weight formulation.
    # h2 part rides the MXU; the K=4 node_properties part is an unrolled VPU
    # broadcast-FMA (drops the second MXU push/drain, avoids an unaligned
    # 64+4 lane concat).  Mathematically identical to the torch.cat + fc3.
    logits = jnp.dot(h2.astype(jnp.bfloat16), w3a_ref[...],
                     preferred_element_type=jnp.float32)
    npf = nodep_ref[...].astype(jnp.float32)   # [TB, 4]
    w3b = w3b_ref[...]                         # [4, N]
    side = b3_ref[...]                         # [1, N]
    for k in range(4):                         # static 4-way unroll
        side = side + npf[:, k:k + 1] * w3b[k:k + 1, :]
    logits = logits + side

    # inf_mask = clamp(log(mask), min=FLOAT_MIN): exact formula (EUP log is on an
    # otherwise-idle slot), valid for fractional masks, log(0) -> -inf -> FLOAT_MIN.
    inf_mask = jnp.maximum(jnp.log(mask_ref[...]), FLOAT_MIN)

    masked_ref[...] = logits + inf_mask
    feat_ref[...] = logits
    # Fused value branch: SlimFC(num_outputs -> 1) on self._features, done as an
    # f32 lane reduction (XLU) instead of an N=1 MXU matmul.
    val_ref[...] = jnp.sum(logits * wv_ref[...], axis=-1, keepdims=True) + bv_ref[...]


def select_task_forward(state, node_props, action_mask, params, *, tb=None):
    """Fused forward + value head.

    Returns (masked_logits [B,N], features [B,N], value [B,1]).
    The RLlib RNN `state` passthrough is an identity and stays outside the kernel.
    """
    B, S = state.shape
    NP = node_props.shape[1]
    N = action_mask.shape[1]
    F1 = params["w1"].shape[1]
    F2 = params["w2"].shape[1]

    bp = _round_up(B, 8)
    cores = _tensorcores_per_chip()
    if tb is None:
        if cores > 1 and bp >= 2 * 8:
            tb = _round_up(pl.cdiv(bp, cores), 8)   # one tile per TensorCore (v7x)
        else:
            tb = bp                                  # single grid step (v5e/v6e)
    tb = min(tb, bp)
    bp = _round_up(bp, tb)
    grid = (bp // tb,)

    if bp != B:  # only for batches that aren't a tile multiple; demo path skips this
        pad = bp - B
        state = jnp.pad(state, ((0, pad), (0, 0)))
        node_props = jnp.pad(node_props, ((0, pad), (0, 0)))
        action_mask = jnp.pad(action_mask, ((0, pad), (0, 0)), constant_values=1.0)

    def row_spec(cols):            # streamed per-batch-tile operands
        return pl.BlockSpec((tb, cols), lambda i: (i, 0))

    def resident(shape):           # weights/biases: same block every step -> VMEM-resident
        return pl.BlockSpec(shape, lambda i: (0, 0))

    masked, features, value = pl.pallas_call(
        _select_task_kernel,
        out_shape=(
            jax.ShapeDtypeStruct((bp, N), jnp.float32),
            jax.ShapeDtypeStruct((bp, N), jnp.float32),
            jax.ShapeDtypeStruct((bp, 1), jnp.float32),
        ),
        grid=grid,
        in_specs=[
            row_spec(S),                 # state
            row_spec(NP),                # node_properties
            row_spec(N),                 # action_mask (raw, no lane padding)
            resident((S, F1)),           # w1
            resident((1, F1)),           # b1
            resident((F1, F2)),          # w2
            resident((1, F2)),           # b2
            resident((F2, N)),           # w3a
            resident((4, N)),            # w3b
            resident((1, N)),            # b3
            resident((1, N)),            # wv (value head, stored as a row)
            resident((1, 1)),            # bv
        ],
        out_specs=(
            pl.BlockSpec((tb, N), lambda i: (i, 0)),
            pl.BlockSpec((tb, N), lambda i: (i, 0)),
            pl.BlockSpec((tb, 1), lambda i: (i, 0)),
        ),
        compiler_params=pltpu.CompilerParams(
            dimension_semantics=("parallel",)),      # shards batch tiles across v7x TCs
    )(
        state, node_props, action_mask,
        params["w1"], params["b1"],
        params["w2"], params["b2"],
        params["w3a"], params["w3b"], params["b3"],
        params["wv"], params["bv"],
    )

    if bp != B:
        masked, features, value = masked[:B], features[:B], value[:B]
    return masked, features, value


def init_params(key, state_size, fc1_units, fc2_units, num_outputs):
    """Deterministic synthetic parameters (nn.Linear shapes, pre-transposed).

    Matmul weights are bf16 (single-pass MXU, halves resident-weight footprint);
    biases, the K=4 fc3 slice and the value head stay f32 (VPU/XLU epilogues,
    v5e-safe).  No fp8 on purpose — weights are tiny and already VMEM-resident.
    """
    ks = jax.random.split(key, 8)
    scale = 0.1

    w1 = scale * jax.random.normal(ks[0], (state_size, fc1_units), jnp.float32)
    b1 = scale * jax.random.normal(ks[1], (1, fc1_units), jnp.float32)
    w2 = scale * jax.random.normal(ks[2], (fc1_units, fc2_units), jnp.float32)
    b2 = scale * jax.random.normal(ks[3], (1, fc2_units), jnp.float32)
    # fc3 takes concat([h2, node_properties(4)]) -> num_outputs
    w3_full = scale * jax.random.normal(
        ks[4], (fc2_units + 4, num_outputs), jnp.float32)
    b3 = scale * jax.random.normal(ks[5], (1, num_outputs), jnp.float32)
    # value branch: SlimFC(num_outputs -> 1), normc_initializer(0.01)-ish scale
    wv = 0.01 * jax.random.normal(ks[6], (1, num_outputs), jnp.float32)
    bv = jnp.zeros((1, 1), jnp.float32)

    return {
        "w1": w1.astype(jnp.bfloat16), "b1": b1,
        "w2": w2.astype(jnp.bfloat16), "b2": b2,
        "w3a": w3_full[:fc2_units].astype(jnp.bfloat16),
        "w3b": w3_full[fc2_units:],            # f32: used on the VPU in-kernel
        "b3": b3,
        "wv": wv, "bv": bv,
    }


def _reference(state, node_props, action_mask, p):
    """Plain-JAX reference with the same bf16 MXU operands / f32 accumulation."""
    def mm(a, w):
        return jnp.dot(a.astype(jnp.bfloat16), w,
                       preferred_element_type=jnp.float32)

    h1 = jnp.maximum(mm(state, p["w1"]) + p["b1"], 0.0)
    h2 = jnp.maximum(mm(h1, p["w2"]) + p["b2"], 0.0)
    logits = mm(h2, p["w3a"]) + node_props.astype(jnp.float32) @ p["w3b"] + p["b3"]
    inf_mask = jnp.maximum(jnp.log(action_mask), FLOAT_MIN)
    value = jnp.sum(logits * p["wv"], axis=-1, keepdims=True) + p["bv"]
    return logits + inf_mask, logits, value


if __name__ == "__main__":
    key = jax.random.PRNGKey(0)
    k_state, k_node, k_mask, k_params = jax.random.split(key, 4)

    # Batched (latency-bound model; widths match the module config).
    B = 256
    state_size = 32
    fc1_units = 64
    fc2_units = 64
    num_outputs = 16

    state = jax.random.normal(k_state, (B, state_size), jnp.float32)
    node_props = jax.random.normal(k_node, (B, 4), jnp.float32)
    # Binary action mask (at least one valid action per row).
    action_mask = (jax.random.uniform(k_mask, (B, num_outputs)) > 0.3).astype(jnp.float32)
    action_mask = action_mask.at[:, 0].set(1.0)

    params = init_params(k_params, state_size, fc1_units, fc2_units, num_outputs)

    masked_logits, features, value = select_task_forward(
        state, node_props, action_mask, params)
    jax.block_until_ready((masked_logits, features, value))

    ref_masked, ref_feat, ref_val = _reference(state, node_props, action_mask, params)
    assert jnp.allclose(features, ref_feat, atol=2e-3, rtol=2e-3), \
        float(jnp.max(jnp.abs(features - ref_feat)))
    assert jnp.allclose(masked_logits, ref_masked, atol=2e-3, rtol=2e-3)
    assert jnp.allclose(value, ref_val, atol=2e-3, rtol=2e-3), \
        float(jnp.max(jnp.abs(value - ref_val)))

    # TODO(synk): RLlib's `state`/`seq_lens` passthrough is an identity (no compute);
    # it is intentionally left outside the kernel.
    print("KERNEL_OK")
</pallas_src>

<mosaic_0001>
module attributes {stable_mosaic.version = 11 : i64} {
  func.func @_select_task_kernel(%arg0: i32, %arg1: memref<256x32xf32, #tpu.memory_space<vmem>>, %arg2: memref<256x4xf32, #tpu.memory_space<vmem>>, %arg3: memref<256x16xf32, #tpu.memory_space<vmem>>, %arg4: memref<32x64xbf16, #tpu.memory_space<vmem>>, %arg5: memref<1x64xf32, #tpu.memory_space<vmem>>, %arg6: memref<64x64xbf16, #tpu.memory_space<vmem>>, %arg7: memref<1x64xf32, #tpu.memory_space<vmem>>, %arg8: memref<64x16xbf16, #tpu.memory_space<vmem>>, %arg9: memref<4x16xf32, #tpu.memory_space<vmem>>, %arg10: memref<1x16xf32, #tpu.memory_space<vmem>>, %arg11: memref<1x16xf32, #tpu.memory_space<vmem>>, %arg12: memref<1x1xf32, #tpu.memory_space<vmem>>, %arg13: memref<256x16xf32, #tpu.memory_space<vmem>>, %arg14: memref<256x16xf32, #tpu.memory_space<vmem>>, %arg15: memref<256x1xf32, #tpu.memory_space<vmem>>) attributes {dimension_semantics = [#tpu.dimension_semantics<parallel>], iteration_bounds = array<i64: 1>, scalar_prefetch = 0 : i64, scratch_operands = 0 : i64, tpu.core_type = #tpu.core_type<tc>, window_params = [{transform_indices = @transform_0, window_bounds = array<i64: 256, 32>}, {transform_indices = @transform_1, window_bounds = array<i64: 256, 4>}, {transform_indices = @transform_2, window_bounds = array<i64: 256, 16>}, {pipeline_mode = #tpu.pipeline_mode<synchronous>, transform_indices = @transform_3, window_bounds = array<i64: 32, 64>}, {pipeline_mode = #tpu.pipeline_mode<synchronous>, transform_indices = @transform_4, window_bounds = array<i64: 1, 64>}, {pipeline_mode = #tpu.pipeline_mode<synchronous>, transform_indices = @transform_5, window_bounds = array<i64: 64, 64>}, {pipeline_mode = #tpu.pipeline_mode<synchronous>, transform_indices = @transform_6, window_bounds = array<i64: 1, 64>}, {pipeline_mode = #tpu.pipeline_mode<synchronous>, transform_indices = @transform_7, window_bounds = array<i64: 64, 16>}, {pipeline_mode = #tpu.pipeline_mode<synchronous>, transform_indices = @transform_8, window_bounds = array<i64: 4, 16>}, {pipeline_mode = #tpu.pipeline_mode<synchronous>, transform_indices = @transform_9, window_bounds = array<i64: 1, 16>}, {pipeline_mode = #tpu.pipeline_mode<synchronous>, transform_indices = @transform_10, window_bounds = array<i64: 1, 16>}, {pipeline_mode = #tpu.pipeline_mode<synchronous>, transform_indices = @transform_11, window_bounds = array<i64: 1, 1>}, {transform_indices = @transform_12, window_bounds = array<i64: 256, 16>}, {transform_indices = @transform_13, window_bounds = array<i64: 256, 16>}, {transform_indices = @transform_14, window_bounds = array<i64: 256, 1>}]} {
    %c0 = arith.constant 0 : index
    %c0_0 = arith.constant 0 : index
    %0 = vector.load %arg1[%c0, %c0_0] : memref<256x32xf32, #tpu.memory_space<vmem>>, vector<256x32xf32>
    %1 = arith.truncf %0 : vector<256x32xf32> to vector<256x32xbf16>
    %c0_1 = arith.constant 0 : index
    %c0_2 = arith.constant 0 : index
    %2 = vector.load %arg4[%c0_1, %c0_2] : memref<32x64xbf16, #tpu.memory_space<vmem>>, vector<32x64xbf16>
    %cst = arith.constant dense<0.000000e+00> : vector<256x64xf32>
    %3 = tpu.matmul %1, %2, %cst {dimension_numbers = #tpu.dot_dimension_numbers<[1], [0], [0], [1], [0, 0, 1, 1], [], []>} : vector<256x32xbf16>, vector<32x64xbf16>, vector<256x64xf32> -> vector<256x64xf32>
    %c0_3 = arith.constant 0 : index
    %c0_4 = arith.constant 0 : index
    %4 = vector.load %arg5[%c0_3, %c0_4] : memref<1x64xf32, #tpu.memory_space<vmem>>, vector<1x64xf32>
    %5 = vector.broadcast %4 : vector<1x64xf32> to vector<256x64xf32>
    %6 = arith.addf %3, %5 : vector<256x64xf32>
    %cst_5 = arith.constant 0.000000e+00 : f32
    %7 = vector.broadcast %cst_5 : f32 to vector<256x64xf32>
    %8 = arith.maximumf %6, %7 : vector<256x64xf32>
    %9 = arith.truncf %8 : vector<256x64xf32> to vector<256x64xbf16>
    %c0_6 = arith.constant 0 : index
    %c0_7 = arith.constant 0 : index
    %10 = vector.load %arg6[%c0_6, %c0_7] : memref<64x64xbf16, #tpu.memory_space<vmem>>, vector<64x64xbf16>
    %cst_8 = arith.constant dense<0.000000e+00> : vector<256x64xf32>
    %11 = tpu.matmul %9, %10, %cst_8 {dimension_numbers = #tpu.dot_dimension_numbers<[1], [0], [0], [1], [0, 0, 1, 1], [], []>} : vector<256x64xbf16>, vector<64x64xbf16>, vector<256x64xf32> -> vector<256x64xf32>
    %c0_9 = arith.constant 0 : index
    %c0_10 = arith.constant 0 : index
    %12 = vector.load %arg7[%c0_9, %c0_10] : memref<1x64xf32, #tpu.memory_space<vmem>>, vector<1x64xf32>
    %13 = vector.broadcast %12 : vector<1x64xf32> to vector<256x64xf32>
    %14 = arith.addf %11, %13 : vector<256x64xf32>
    %cst_11 = arith.constant 0.000000e+00 : f32
    %15 = vector.broadcast %cst_11 : f32 to vector<256x64xf32>
    %16 = arith.maximumf %14, %15 : vector<256x64xf32>
    %17 = arith.truncf %16 : vector<256x64xf32> to vector<256x64xbf16>
    %c0_12 = arith.constant 0 : index
    %c0_13 = arith.constant 0 : index
    %18 = vector.load %arg8[%c0_12, %c0_13] : memref<64x16xbf16, #tpu.memory_space<vmem>>, vector<64x16xbf16>
    %cst_14 = arith.constant dense<0.000000e+00> : vector<256x16xf32>
    %19 = tpu.matmul %17, %18, %cst_14 {dimension_numbers = #tpu.dot_dimension_numbers<[1], [0], [0], [1], [0, 0, 1, 1], [], []>} : vector<256x64xbf16>, vector<64x16xbf16>, vector<256x16xf32> -> vector<256x16xf32>
    %c0_15 = arith.constant 0 : index
    %c0_16 = arith.constant 0 : index
    %20 = vector.load %arg2[%c0_15, %c0_16] : memref<256x4xf32, #tpu.memory_space<vmem>>, vector<256x4xf32>
    %c0_17 = arith.constant 0 : index
    %c0_18 = arith.constant 0 : index
    %21 = vector.load %arg9[%c0_17, %c0_18] : memref<4x16xf32, #tpu.memory_space<vmem>>, vector<4x16xf32>
    %c0_19 = arith.constant 0 : index
    %c0_20 = arith.constant 0 : index
    %22 = vector.load %arg10[%c0_19, %c0_20] : memref<1x16xf32, #tpu.memory_space<vmem>>, vector<1x16xf32>
    %23 = vector.extract_strided_slice %20 {offsets = [0, 0], sizes = [256, 1], strides = [1, 1]} : vector<256x4xf32> to vector<256x1xf32>
    %24 = vector.extract_strided_slice %21 {offsets = [0, 0], sizes = [1, 16], strides = [1, 1]} : vector<4x16xf32> to vector<1x16xf32>
    %25 = vector.broadcast %23 : vector<256x1xf32> to vector<256x16xf32>
    %26 = vector.broadcast %24 : vector<1x16xf32> to vector<256x16xf32>
    %27 = arith.mulf %25, %26 : vector<256x16xf32>
    %28 = vector.broadcast %22 : vector<1x16xf32> to vector<256x16xf32>
    %29 = arith.addf %28, %27 : vector<256x16xf32>
    %30 = vector.extract_strided_slice %20 {offsets = [0, 1], sizes = [256, 1], strides = [1, 1]} : vector<256x4xf32> to vector<256x1xf32>
    %31 = vector.extract_strided_slice %21 {offsets = [1, 0], sizes = [1, 16], strides = [1, 1]} : vector<4x16xf32> to vector<1x16xf32>
    %32 = vector.broadcast %30 : vector<256x1xf32> to vector<256x16xf32>
    %33 = vector.broadcast %31 : vector<1x16xf32> to vector<256x16xf32>
    %34 = arith.mulf %32, %33 : vector<256x16xf32>
    %35 = arith.addf %29, %34 : vector<256x16xf32>
    %36 = vector.extract_strided_slice %20 {offsets = [0, 2], sizes = [256, 1], strides = [1, 1]} : vector<256x4xf32> to vector<256x1xf32>
    %37 = vector.extract_strided_slice %21 {offsets = [2, 0], sizes = [1, 16], strides = [1, 1]} : vector<4x16xf32> to vector<1x16xf32>
    %38 = vector.broadcast %36 : vector<256x1xf32> to vector<256x16xf32>
    %39 = vector.broadcast %37 : vector<1x16xf32> to vector<256x16xf32>
    %40 = arith.mulf %38, %39 : vector<256x16xf32>
    %41 = arith.addf %35, %40 : vector<256x16xf32>
    %42 = vector.extract_strided_slice %20 {offsets = [0, 3], sizes = [256, 1], strides = [1, 1]} : vector<256x4xf32> to vector<256x1xf32>
    %43 = vector.extract_strided_slice %21 {offsets = [3, 0], sizes = [1, 16], strides = [1, 1]} : vector<4x16xf32> to vector<1x16xf32>
    %44 = vector.broadcast %42 : vector<256x1xf32> to vector<256x16xf32>
    %45 = vector.broadcast %43 : vector<1x16xf32> to vector<256x16xf32>
    %46 = arith.mulf %44, %45 : vector<256x16xf32>
    %47 = arith.addf %41, %46 : vector<256x16xf32>
    %48 = arith.addf %19, %47 : vector<256x16xf32>
    %c0_21 = arith.constant 0 : index
    %c0_22 = arith.constant 0 : index
    %49 = vector.load %arg3[%c0_21, %c0_22] : memref<256x16xf32, #tpu.memory_space<vmem>>, vector<256x16xf32>
    %50 = math.log %49 : vector<256x16xf32>
    %cst_23 = arith.constant -3.40282347E+38 : f32
    %51 = vector.broadcast %cst_23 : f32 to vector<256x16xf32>
    %52 = arith.maximumf %50, %51 : vector<256x16xf32>
    %53 = arith.addf %48, %52 : vector<256x16xf32>
    %c0_24 = arith.constant 0 : index
    %c0_25 = arith.constant 0 : index
    %54 = vector.load %arg13[%c0_24, %c0_25] : memref<256x16xf32, #tpu.memory_space<vmem>>, vector<256x16xf32>
    tpu.vector_store %arg13[%c0_24, %c0_25], %53 {strides = array<i32>} : memref<256x16xf32, #tpu.memory_space<vmem>>, vector<256x16xf32>,
    %c0_26 = arith.constant 0 : index
    %c0_27 = arith.constant 0 : index
    %55 = vector.load %arg14[%c0_26, %c0_27] : memref<256x16xf32, #tpu.memory_space<vmem>>, vector<256x16xf32>
    tpu.vector_store %arg14[%c0_26, %c0_27], %48 {strides = array<i32>} : memref<256x16xf32, #tpu.memory_space<vmem>>, vector<256x16xf32>,
    %c0_28 = arith.constant 0 : index
    %c0_29 = arith.constant 0 : index
    %56 = vector.load %arg11[%c0_28, %c0_29] : memref<1x16xf32, #tpu.memory_space<vmem>>, vector<1x16xf32>
    %57 = vector.broadcast %56 : vector<1x16xf32> to vector<256x16xf32>
    %58 = arith.mulf %48, %57 : vector<256x16xf32>
    %cst_30 = arith.constant dense<0.000000e+00> : vector<256xf32>
    %59 = vector.multi_reduction <add>, %58, %cst_30 [1] : vector<256x16xf32> to vector<256xf32>
    %60 = vector.shape_cast %59 : vector<256xf32> to vector<256x1xf32>
    %c0_31 = arith.constant 0 : index
    %c0_32 = arith.constant 0 : index
    %61 = vector.load %arg12[%c0_31, %c0_32] : memref<1x1xf32, #tpu.memory_space<vmem>>, vector<1x1xf32>
    %62 = vector.broadcast %61 : vector<1x1xf32> to vector<256x1xf32>
    %63 = arith.addf %60, %62 : vector<256x1xf32>
    %c0_33 = arith.constant 0 : index
    %c0_34 = arith.constant 0 : index
    %64 = vector.load %arg15[%c0_33, %c0_34] : memref<256x1xf32, #tpu.memory_space<vmem>>, vector<256x1xf32>
    tpu.vector_store %arg15[%c0_33, %c0_34], %63 {strides = array<i32>} : memref<256x1xf32, #tpu.memory_space<vmem>>, vector<256x1xf32>,
    return
  }
  func.func @transform_0(%arg0: i32) -> (i32, i32) {
    %c0_i32 = arith.constant 0 : i32
    %c0_i32_0 = arith.constant 0 : i32
    return %arg0, %c0_i32 : i32, i32
  }
  func.func @transform_1(%arg0: i32) -> (i32, i32) {
    %c0_i32 = arith.constant 0 : i32
    %c0_i32_0 = arith.constant 0 : i32
    return %arg0, %c0_i32 : i32, i32
  }
  func.func @transform_2(%arg0: i32) -> (i32, i32) {
    %c0_i32 = arith.constant 0 : i32
    %c0_i32_0 = arith.constant 0 : i32
    return %arg0, %c0_i32 : i32, i32
  }
  func.func @transform_3(%arg0: i32) -> (i32, i32) {
    %c0_i32 = arith.constant 0 : i32
    %c0_i32_0 = arith.constant 0 : i32
    %c0_i32_1 = arith.constant 0 : i32
    return %c0_i32, %c0_i32_0 : i32, i32
  }
  func.func @transform_4(%arg0: i32) -> (i32, i32) {
    %c0_i32 = arith.constant 0 : i32
    %c0_i32_0 = arith.constant 0 : i32
    %c0_i32_1 = arith.constant 0 : i32
    return %c0_i32, %c0_i32_0 : i32, i32
  }
  func.func @transform_5(%arg0: i32) -> (i32, i32) {
    %c0_i32 = arith.constant 0 : i32
    %c0_i32_0 = arith.constant 0 : i32
    %c0_i32_1 = arith.constant 0 : i32
    return %c0_i32, %c0_i32_0 : i32, i32
  }
  func.func @transform_6(%arg0: i32) -> (i32, i32) {
    %c0_i32 = arith.constant 0 : i32
    %c0_i32_0 = arith.constant 0 : i32
    %c0_i32_1 = arith.constant 0 : i32
    return %c0_i32, %c0_i32_0 : i32, i32
  }
  func.func @transform_7(%arg0: i32) -> (i32, i32) {
    %c0_i32 = arith.constant 0 : i32
    %c0_i32_0 = arith.constant 0 : i32
    %c0_i32_1 = arith.constant 0 : i32
    return %c0_i32, %c0_i32_0 : i32, i32
  }
  func.func @transform_8(%arg0: i32) -> (i32, i32) {
    %c0_i32 = arith.constant 0 : i32
    %c0_i32_0 = arith.constant 0 : i32
    %c0_i32_1 = arith.constant 0 : i32
    return %c0_i32, %c0_i32_0 : i32, i32
  }
  func.func @transform_9(%arg0: i32) -> (i32, i32) {
    %c0_i32 = arith.constant 0 : i32
    %c0_i32_0 = arith.constant 0 : i32
    %c0_i32_1 = arith.constant 0 : i32
    return %c0_i32, %c0_i32_0 : i32, i32
  }
  func.func @transform_10(%arg0: i32) -> (i32, i32) {
    %c0_i32 = arith.constant 0 : i32
    %c0_i32_0 = arith.constant 0 : i32
    %c0_i32_1 = arith.constant 0 : i32
    return %c0_i32, %c0_i32_0 : i32, i32
  }
  func.func @transform_11(%arg0: i32) -> (i32, i32) {
    %c0_i32 = arith.constant 0 : i32
    %c0_i32_0 = arith.constant 0 : i32
    %c0_i32_1 = arith.constant 0 : i32
    return %c0_i32, %c0_i32_0 : i32, i32
  }
  func.func @transform_12(%arg0: i32) -> (i32, i32) {
    %c0_i32 = arith.constant 0 : i32
    %c0_i32_0 = arith.constant 0 : i32
    return %arg0, %c0_i32 : i32, i32
  }
  func.func @transform_13(%arg0: i32) -> (i32, i32) {
    %c0_i32 = arith.constant 0 : i32
    %c0_i32_0 = arith.constant 0 : i32
    return %arg0, %c0_i32 : i32, i32
  }
  func.func @transform_14(%arg0: i32) -> (i32, i32) {
    %c0_i32 = arith.constant 0 : i32
    %c0_i32_0 = arith.constant 0 : i32
    return %arg0, %c0_i32 : i32, i32
  }
}

</mosaic_0001>

<llo_original>
// kernel: tpu_custom_call.1
$region0: #{tpu_custom_call.1}
  #allocation0 [shape = 'u32[]', space=smem, size = 0x4, offset = 0x4, fixed_abs, tag = 'smem constant byte address 0x4 - core index']
  #allocation1 [shape = 'u32[144,128]{1,0:T(1,128)}', space=vmem, size = 0x12000, scoped, tag = 'internal scratch']
  #allocation2 [shape = 'f32[1,1]{1,0:T(1,128)S(1)}', space=vmem, size = 0x200, scoped, tag = 'scoped memory for tpu_custom_call.1']
  %s0 = inlined_call_operand.vmem [shape: f32[256,32], index: 0, kind: input, shape index: {}]
  %s1 = inlined_call_operand.vmem [shape: f32[256,4], index: 1, kind: input, shape index: {}]
  %s2 = inlined_call_operand.vmem [shape: f32[256,16], index: 2, kind: input, shape index: {}]
  %s3 = inlined_call_operand.vmem [shape: bf16[32,64], index: 3, kind: input, shape index: {}]
  %s4 = inlined_call_operand.vmem [shape: f32[1,64], index: 4, kind: input, shape index: {}]
  %s5 = inlined_call_operand.vmem [shape: bf16[64,64], index: 5, kind: input, shape index: {}]
  %s6 = inlined_call_operand.vmem [shape: f32[1,64], index: 6, kind: input, shape index: {}]
  %s7 = inlined_call_operand.vmem [shape: bf16[64,16], index: 7, kind: input, shape index: {}]
  %s8 = inlined_call_operand.vmem [shape: f32[4,16], index: 8, kind: input, shape index: {}]
  %s9 = inlined_call_operand.vmem [shape: f32[1,16], index: 9, kind: input, shape index: {}]
  %s10 = inlined_call_operand.vmem [shape: f32[1,16], index: 10, kind: input, shape index: {}]
  %s11 = inlined_call_operand.<no memory space> [shape: f32[1,1], index: 11, kind: input, shape index: {}]
  %s12 = inlined_call_operand.vmem [shape: f32[256,16], index: 12, kind: output, shape index: {0}]
  %s13 = inlined_call_operand.vmem [shape: f32[256,16], index: 13, kind: output, shape index: {1}]
  %s14 = inlined_call_operand.vmem [shape: f32[256,1], index: 14, kind: output, shape index: {2}]
  %15 = xla_tuple %s12, %s13, %s14
  %s16 = sld [smem:[#allocation0]]
  $region74: #{tpu_custom_call.1} parent=0
    _
  %s18 = ssub.s32 1, %s16
  %s19 = scalar_select 0, %s18, %s16
  %v20 = vstv %s11
  %21 = vst [vmem:[#allocation2] sm:$0x1] %v20
  // Predicated region
  $region2: #{tpu_custom_call.1} parent=0 // pred_check
    _
  $region3: #{tpu_custom_call.1} parent=0 // pred_check_branch
    %23 = sbr.rel (0) target = $region5
  $region4: #{tpu_custom_call.1} parent=0 // pred_region
    _
  $region5: #{tpu_custom_call.1} parent=0 // pred_fallthru
    _
  // Predicated region
  $region6: #{tpu_custom_call.1} parent=0 // pred_check
    _
  $region7: #{tpu_custom_call.1} parent=0 // pred_check_branch
    %25 = sbr.rel (0) target = $region9
  $region8: #{tpu_custom_call.1} parent=0 // pred_region
    _
  $region9: #{tpu_custom_call.1} parent=0 // pred_fallthru
    _
  // Predicated region
  $region10: #{tpu_custom_call.1} parent=0 // pred_check
    _
  $region11: #{tpu_custom_call.1} parent=0 // pred_check_branch
    %27 = sbr.rel (0) target = $region13
  $region12: #{tpu_custom_call.1} parent=0 // pred_region
    _
  $region13: #{tpu_custom_call.1} parent=0 // pred_fallthru
    _
  // Predicated region
  $region14: #{tpu_custom_call.1} parent=0 // pred_check
    _
  $region15: #{tpu_custom_call.1} parent=0 // pred_check_branch
    %29 = sbr.rel (0) target = $region17
  $region16: #{tpu_custom_call.1} parent=0 // pred_region
    _
  $region17: #{tpu_custom_call.1} parent=0 // pred_fallthru
    _
  // Predicated region
  $region18: #{tpu_custom_call.1} parent=0 // pred_check
    _
  $region19: #{tpu_custom_call.1} parent=0 // pred_check_branch
    %31 = sbr.rel (0) target = $region21
  $region20: #{tpu_custom_call.1} parent=0 // pred_region
    _
  $region21: #{tpu_custom_call.1} parent=0 // pred_fallthru
    _
  // Predicated region
  $region22: #{tpu_custom_call.1} parent=0 // pred_check
    _
  $region23: #{tpu_custom_call.1} parent=0 // pred_check_branch
    %33 = sbr.rel (0) target = $region25
  $region24: #{tpu_custom_call.1} parent=0 // pred_region
    _
  $region25: #{tpu_custom_call.1} parent=0 // pred_fallthru
    _
  // Predicated region
  $region26: #{tpu_custom_call.1} parent=0 // pred_check
    _
  $region27: #{tpu_custom_call.1} parent=0 // pred_check_branch
    %35 = sbr.rel (0) target = $region29
  $region28: #{tpu_custom_call.1} parent=0 // pred_region
    _
  $region29: #{tpu_custom_call.1} parent=0 // pred_fallthru
    _
  // Predicated region
  $region30: #{tpu_custom_call.1} parent=0 // pred_check
    _
  $region31: #{tpu_custom_call.1} parent=0 // pred_check_branch
    %37 = sbr.rel (0) target = $region33
  $region32: #{tpu_custom_call.1} parent=0 // pred_region
    _
  $region33: #{tpu_custom_call.1} parent=0 // pred_fallthru
    _
  // Predicated region
  $region34: #{tpu_custom_call.1} parent=0 // pred_check
    _
  $region35: #{tpu_custom_call.1} parent=0 // pred_check_branch
    %39 = sbr.rel (0) target = $region37
  $region36: #{tpu_custom_call.1} parent=0 // pred_region
    _
  $region37: #{tpu_custom_call.1} parent=0 // pred_fallthru
    _
  // Predicated region
  $region38: #{tpu_custom_call.1} parent=0 // pred_check
    _
  $region39: #{tpu_custom_call.1} parent=0 // pred_check_branch
    %41 = sbr.rel (0) target = $region41
  $region40: #{tpu_custom_call.1} parent=0 // pred_region
    _
  $region41: #{tpu_custom_call.1} parent=0 // pred_fallthru
    _
  // Predicated region
  $region42: #{tpu_custom_call.1} parent=0 // pred_check
    _
  $region43: #{tpu_custom_call.1} parent=0 // pred_check_branch
    %43 = sbr.rel (0) target = $region45
  $region44: #{tpu_custom_call.1} parent=0 // pred_region
    _
  $region45: #{tpu_custom_call.1} parent=0 // pred_fallthru
    _
  // Predicated region
  $region46: #{tpu_custom_call.1} parent=0 // pred_check
    _
  $region47: #{tpu_custom_call.1} parent=0 // pred_check_branch
    %45 = sbr.rel (0) target = $region49
  $region48: #{tpu_custom_call.1} parent=0 // pred_region
    _
  $region49: #{tpu_custom_call.1} parent=0 // pred_fallthru
    _
  %v47 = vld [vmem:[%s0] sm:$0xff]
  %v48 = vld [vmem:[%s0 + $0x8] sm:$0xff]
  %v49 = vld [vmem:[%s0 + $0x10] sm:$0xff]
  %v50 = vld [vmem:[%s0 + $0x18] sm:$0xff]
  %v51 = vld [vmem:[%s0 + $0x20] sm:$0xff]
  %v52 = vld [vmem:[%s0 + $0x28] sm:$0xff]
  %v53 = vld [vmem:[%s0 + $0x30] sm:$0xff]
  %v54 = vld [vmem:[%s0 + $0x38] sm:$0xff]
  %v55 = vld [vmem:[%s0 + $0x40] sm:$0xff]
  %v56 = vld [vmem:[%s0 + $0x48] sm:$0xff]
  %v57 = vld [vmem:[%s0 + $0x50] sm:$0xff]
  %v58 = vld [vmem:[%s0 + $0x58] sm:$0xff]
  %v59 = vld [vmem:[%s0 + $0x60] sm:$0xff]
  %v60 = vld [vmem:[%s0 + $0x68] sm:$0xff]
  %v61 = vld [vmem:[%s0 + $0x70] sm:$0xff]
  %v62 = vld [vmem:[%s0 + $0x78] sm:$0xff]
  %v63 = vld [vmem:[%s0 + $0x80] sm:$0xff]
  %v64 = vld [vmem:[%s0 + $0x88] sm:$0xff]
  %v65 = vld [vmem:[%s0 + $0x90] sm:$0xff]
  %v66 = vld [vmem:[%s0 + $0x98] sm:$0xff]
  %v67 = vld [vmem:[%s0 + $0xa0] sm:$0xff]
  %v68 = vld [vmem:[%s0 + $0xa8] sm:$0xff]
  %v69 = vld [vmem:[%s0 + $0xb0] sm:$0xff]
  %v70 = vld [vmem:[%s0 + $0xb8] sm:$0xff]
  %v71 = vld [vmem:[%s0 + $0xc0] sm:$0xff]
  %v72 = vld [vmem:[%s0 + $0xc8] sm:$0xff]
  %v73 = vld [vmem:[%s0 + $0xd0] sm:$0xff]
  %v74 = vld [vmem:[%s0 + $0xd8] sm:$0xff]
  %v75 = vld [vmem:[%s0 + $0xe0] sm:$0xff]
  %v76 = vld [vmem:[%s0 + $0xe8] sm:$0xff]
  %v77 = vld [vmem:[%s0 + $0xf0] sm:$0xff]
  %v78 = vld [vmem:[%s0 + $0xf8] sm:$0xff]
  %v79 = vpack.c.bf16 %v48, %v47
  %v80 = vpack.c.bf16 %v50, %v49
  %v81 = vpack.c.bf16 %v52, %v51
  %v82 = vpack.c.bf16 %v54, %v53
  %v83 = vpack.c.bf16 %v56, %v55
  %v84 = vpack.c.bf16 %v58, %v57
  %v85 = vpack.c.bf16 %v60, %v59
  %v86 = vpack.c.bf16 %v62, %v61
  %v87 = vpack.c.bf16 %v64, %v63
  %v88 = vpack.c.bf16 %v66, %v65
  %v89 = vpack.c.bf16 %v68, %v67
  %v90 = vpack.c.bf16 %v70, %v69
  %v91 = vpack.c.bf16 %v72, %v71
  %v92 = vpack.c.bf16 %v74, %v73
  %v93 = vpack.c.bf16 %v76, %v75
  %v94 = vpack.c.bf16 %v78, %v77
  %v95 = vld [vmem:[%s3] sm:$0xf]
  %v96 = vld [vmem:[%s3 + $0x4] sm:$0xf]
  %v97 = vld [vmem:[%s3 + $0x8] sm:$0xf]
  %v98 = vld [vmem:[%s3 + $0xc] sm:$0xf]
  %v99 = vld [vmem:[%s4] sm:$0x1]
  %v101 = vlaneseq
  %v102 = vshrl.u32 %v101, 7
  %v103 = vsub.s32 0, %v102
  %v104 = vrot.slane %v99, %v103
  %v110 = vunpack.c.l.b16 %v95
  %v111 = vunpack.c.l.b16 %v96
  %v112 = vunpack.c.l.b16 %v97
  %v113 = vunpack.c.l.b16 %v98
  %v114 = vpack.c.b16 %v111, %v110
  %v115 = vpack.c.b16 %v113, %v112
  %vm118 = vcmask 261120
  %v120 = vsel %vm118, %v79, 0
  %v123 = vsel %vm118, %v80, 0
  %v126 = vsel %vm118, %v81, 0
  %v129 = vsel %vm118, %v82, 0
  %v132 = vsel %vm118, %v83, 0
  %v135 = vsel %vm118, %v84, 0
  %v138 = vsel %vm118, %v85, 0
  %v141 = vsel %vm118, %v86, 0
  %v144 = vsel %vm118, %v87, 0
  %v147 = vsel %vm118, %v88, 0
  %v150 = vsel %vm118, %v89, 0
  %v153 = vsel %vm118, %v90, 0
  %v156 = vsel %vm118, %v91, 0
  %v159 = vsel %vm118, %v92, 0
  %v162 = vsel %vm118, %v93, 0
  %v165 = vsel %vm118, %v94, 0
  %167 = vmatprep.subr.bf16.mxu0 0
  %168 = vmatpush1.bf16.msra.mxu0 %v114
  %169 = vmatprep.subr.bf16.mxu0 0
  %170 = vmatpush1.bf16.msra.mxu0 %v115
  %171 = vmatprep.subr.bf16.mxu0 0
  %172 = vmatpush1.bf16.msra.mxu0 0
  %173 = vmatprep.subr.bf16.mxu0 0
  %174 = vmatpush1.bf16.msra.mxu0 0
  %175 = vmatprep.subr.bf16.mxu0 0
  %176 = vmatpush1.bf16.msra.mxu0 0
  %177 = vmatprep.subr.bf16.mxu0 0
  %178 = vmatpush1.bf16.msra.mxu0 0
  %179 = vmatprep.subr.bf16.mxu0 0
  %180 = vmatpush1.bf16.msra.mxu0 0
  %181 = vmatprep.subr.bf16.mxu0 0
  %182 = vmatpush1.bf16.msra.mxu0 0
  %183 = vmatprep.subr.bf16.mxu0 0
  %184 = vmatpush1.bf16.msra.mxu0 0
  %185 = vmatprep.subr.bf16.mxu0 0
  %186 = vmatpush1.bf16.msra.mxu0 0
  %187 = vmatprep.subr.bf16.mxu0 0
  %188 = vmatpush1.bf16.msra.mxu0 0
  %189 = vmatprep.subr.bf16.mxu0 0
  %190 = vmatpush1.bf16.msra.mxu0 0
  %191 = vmatprep.subr.bf16.mxu0 0
  %192 = vmatpush1.bf16.msra.mxu0 0
  %193 = vmatprep.subr.bf16.mxu0 0
  %194 = vmatpush1.bf16.msra.mxu0 0
  %195 = vmatprep.subr.bf16.mxu0 0
  %196 = vmatpush1.bf16.msra.mxu0 0
  %197 = vmatprep.subr.bf16.mxu0 0
  %198 = vmatpush1.bf16.msra.mxu0 0
  %199 = vmatprep.mubr.bf16.mxu0 0
  %200 = vmatmul.mubr.bf16.gmra.mrb[0].mxu0 %v120
  %v201 = vpop.f32.mrb[0].mxu0
  %v202 = vadd.f32 %v104, %v201
  %v203 = vpop.f32.mrb[0].mxu0
  %v204 = vpop.f32.mrb[0].mxu0
  %v205 = vadd.f32 %v104, %v204
  %v206 = vpop.f32.mrb[0].mxu0
  %207 = vmatprep.mubr.bf16.mxu0 0
  %208 = vmatmul.mubr.bf16.gmra.mrb[0].mxu0 %v123
  %v209 = vpop.f32.mrb[0].mxu0
  %v210 = vadd.f32 %v104, %v209
  %v211 = vpop.f32.mrb[0].mxu0
  %v212 = vpop.f32.mrb[0].mxu0
  %v213 = vadd.f32 %v104, %v212
  %v214 = vpop.f32.mrb[0].mxu0
  %215 = vmatprep.mubr.bf16.mxu0 0
  %216 = vmatmul.mubr.bf16.gmra.mrb[0].mxu0 %v126
  %v217 = vpop.f32.mrb[0].mxu0
  %v218 = vadd.f32 %v104, %v217
  %v219 = vpop.f32.mrb[0].mxu0
  %v220 = vpop.f32.mrb[0].mxu0
  %v221 = vadd.f32 %v104, %v220
  %v222 = vpop.f32.mrb[0].mxu0
  %223 = vmatprep.mubr.bf16.mxu0 0
  %224 = vmatmul.mubr.bf16.gmra.mrb[0].mxu0 %v129
  %v225 = vpop.f32.mrb[0].mxu0
  %v226 = vadd.f32 %v104, %v225
  %v227 = vpop.f32.mrb[0].mxu0
  %v228 = vpop.f32.mrb[0].mxu0
  %v229 = vadd.f32 %v104, %v228
  %v230 = vpop.f32.mrb[0].mxu0
  %231 = vmatprep.mubr.bf16.mxu0 0
  %232 = vmatmul.mubr.bf16.gmra.mrb[0].mxu0 %v132
  %v233 = vpop.f32.mrb[0].mxu0
  %v234 = vadd.f32 %v104, %v233
  %v235 = vpop.f32.mrb[0].mxu0
  %v236 = vpop.f32.mrb[0].mxu0
  %v237 = vadd.f32 %v104, %v236
  %v238 = vpop.f32.mrb[0].mxu0
  %239 = vmatprep.mubr.bf16.mxu0 0
  %240 = vmatmul.mubr.bf16.gmra.mrb[0].mxu0 %v135
  %v241 = vpop.f32.mrb[0].mxu0
  %v242 = vadd.f32 %v104, %v241
  %v243 = vpop.f32.mrb[0].mxu0
  %v244 = vpop.f32.mrb[0].mxu0
  %v245 = vadd.f32 %v104, %v244
  %v246 = vpop.f32.mrb[0].mxu0
  %247 = vmatprep.mubr.bf16.mxu0 0
  %248 = vmatmul.mubr.bf16.gmra.mrb[0].mxu0 %v138
  %v249 = vpop.f32.mrb[0].mxu0
  %v250 = vadd.f32 %v104, %v249
  %v251 = vpop.f32.mrb[0].mxu0
  %v252 = vpop.f32.mrb[0].mxu0
  %v253 = vadd.f32 %v104, %v252
  %v254 = vpop.f32.mrb[0].mxu0
  %255 = vmatprep.mubr.bf16.mxu0 0
  %256 = vmatmul.mubr.bf16.gmra.mrb[0].mxu0 %v141
  %v257 = vpop.f32.mrb[0].mxu0
  %v258 = vadd.f32 %v104, %v257
  %v259 = vpop.f32.mrb[0].mxu0
  %v260 = vpop.f32.mrb[0].mxu0
  %v261 = vadd.f32 %v104, %v260
  %v262 = vpop.f32.mrb[0].mxu0
  %263 = vmatprep.mubr.bf16.mxu0 0
  %264 = vmatmul.mubr.bf16.gmra.mrb[0].mxu0 %v144
  %v265 = vpop.f32.mrb[0].mxu0
  %v266 = vadd.f32 %v104, %v265
  %v267 = vpop.f32.mrb[0].mxu0
  %v268 = vpop.f32.mrb[0].mxu0
  %v269 = vadd.f32 %v104, %v268
  %v270 = vpop.f32.mrb[0].mxu0
  %271 = vmatprep.mubr.bf16.mxu0 0
  %272 = vmatmul.mubr.bf16.gmra.mrb[0].mxu0 %v147
  %v273 = vpop.f32.mrb[0].mxu0
  %v274 = vadd.f32 %v104, %v273
  %v275 = vpop.f32.mrb[0].mxu0
  %v276 = vpop.f32.mrb[0].mxu0
  %v277 = vadd.f32 %v104, %v276
  %v278 = vpop.f32.mrb[0].mxu0
  %279 = vmatprep.mubr.bf16.mxu0 0
  %280 = vmatmul.mubr.bf16.gmra.mrb[0].mxu0 %v150
  %v281 = vpop.f32.mrb[0].mxu0
  %v282 = vadd.f32 %v104, %v281
  %v283 = vpop.f32.mrb[0].mxu0
  %v284 = vpop.f32.mrb[0].mxu0
  %v285 = vadd.f32 %v104, %v284
  %v286 = vpop.f32.mrb[0].mxu0
  %287 = vmatprep.mubr.bf16.mxu0 0
  %288 = vmatmul.mubr.bf16.gmra.mrb[0].mxu0 %v153
  %v289 = vpop.f32.mrb[0].mxu0
  %v290 = vadd.f32 %v104, %v289
  %v291 = vpop.f32.mrb[0].mxu0
  %v292 = vpop.f32.mrb[0].mxu0
  %v293 = vadd.f32 %v104, %v292
  %v294 = vpop.f32.mrb[0].mxu0
  %295 = vmatprep.mubr.bf16.mxu0 0
  %296 = vmatmul.mubr.bf16.gmra.mrb[0].mxu0 %v156
  %v297 = vpop.f32.mrb[0].mxu0
  %v298 = vadd.f32 %v104, %v297
  %v299 = vpop.f32.mrb[0].mxu0
  %v300 = vpop.f32.mrb[0].mxu0
  %v301 = vadd.f32 %v104, %v300
  %v302 = vpop.f32.mrb[0].mxu0
  %303 = vmatprep.mubr.bf16.mxu0 0
  %304 = vmatmul.mubr.bf16.gmra.mrb[0].mxu0 %v159
  %v305 = vpop.f32.mrb[0].mxu0
  %v306 = vadd.f32 %v104, %v305
  %v307 = vpop.f32.mrb[0].mxu0
  %v308 = vpop.f32.mrb[0].mxu0
  %v309 = vadd.f32 %v104, %v308
  %v310 = vpop.f32.mrb[0].mxu0
  %311 = vmatprep.mubr.bf16.mxu0 0
  %312 = vmatmul.mubr.bf16.gmra.mrb[0].mxu0 %v162
  %v313 = vpop.f32.mrb[0].mxu0
  %v314 = vadd.f32 %v104, %v313
  %v315 = vpop.f32.mrb[0].mxu0
  %v316 = vpop.f32.mrb[0].mxu0
  %v317 = vadd.f32 %v104, %v316
  %v318 = vpop.f32.mrb[0].mxu0
  %319 = vmatprep.mubr.bf16.mxu0 0
  %320 = vmatmul.mubr.bf16.gmra.mrb[0].mxu0 %v165
  %v321 = vpop.f32.mrb[0].mxu0
  %v322 = vadd.f32 %v104, %v321
  %v323 = vpop.f32.mrb[0].mxu0
  %v324 = vpop.f32.mrb[0].mxu0
  %v325 = vadd.f32 %v104, %v324
  %v326 = vpop.f32.mrb[0].mxu0
  %327 = vdwg.mxu0
  %v328 = vmax.f32 %v202, 0.0
  %v329 = vmax.f32 %v205, 0.0
  %v330 = vmax.f32 %v210, 0.0
  %v331 = vmax.f32 %v213, 0.0
  %v332 = vmax.f32 %v218, 0.0
  %v333 = vmax.f32 %v221, 0.0
  %v334 = vmax.f32 %v226, 0.0
  %v335 = vmax.f32 %v229, 0.0
  %v336 = vmax.f32 %v234, 0.0
  %v337 = vmax.f32 %v237, 0.0
  %v338 = vmax.f32 %v242, 0.0
  %v339 = vmax.f32 %v245, 0.0
  %v340 = vmax.f32 %v250, 0.0
  %v341 = vmax.f32 %v253, 0.0
  %v342 = vmax.f32 %v258, 0.0
  %v343 = vmax.f32 %v261, 0.0
  %v344 = vmax.f32 %v266, 0.0
  %v345 = vmax.f32 %v269, 0.0
  %v346 = vmax.f32 %v274, 0.0
  %v347 = vmax.f32 %v277, 0.0
  %v348 = vmax.f32 %v282, 0.0
  %v349 = vmax.f32 %v285, 0.0
  %v350 = vmax.f32 %v290, 0.0
  %v351 = vmax.f32 %v293, 0.0
  %v352 = vmax.f32 %v298, 0.0
  %v353 = vmax.f32 %v301, 0.0
  %v354 = vmax.f32 %v306, 0.0
  %v355 = vmax.f32 %v309, 0.0
  %v356 = vmax.f32 %v314, 0.0
  %v357 = vmax.f32 %v317, 0.0
  %v358 = vmax.f32 %v322, 0.0
  %v359 = vmax.f32 %v325, 0.0
  %v360 = vpack.c.bf16 %v329, %v328
  %v361 = vpack.c.bf16 %v331, %v330
  %v362 = vpack.c.bf16 %v333, %v332
  %v363 = vpack.c.bf16 %v335, %v334
  %v364 = vpack.c.bf16 %v337, %v336
  %v365 = vpack.c.bf16 %v339, %v338
  %v366 = vpack.c.bf16 %v341, %v340
  %v367 = vpack.c.bf16 %v343, %v342
  %v368 = vpack.c.bf16 %v345, %v344
  %v369 = vpack.c.bf16 %v347, %v346
  %v370 = vpack.c.bf16 %v349, %v348
  %v371 = vpack.c.bf16 %v351, %v350
  %v372 = vpack.c.bf16 %v353, %v352
  %v373 = vpack.c.bf16 %v355, %v354
  %v374 = vpack.c.bf16 %v357, %v356
  %v375 = vpack.c.bf16 %v359, %v358
  %v376 = vld [vmem:[%s5] sm:$0xf]
  %v377 = vld [vmem:[%s5 + $0x4] sm:$0xf]
  %v378 = vld [vmem:[%s5 + $0x8] sm:$0xf]
  %v379 = vld [vmem:[%s5 + $0xc] sm:$0xf]
  %v380 = vld [vmem:[%s5 + $0x10] sm:$0xf]
  %v381 = vld [vmem:[%s5 + $0x14] sm:$0xf]
  %v382 = vld [vmem:[%s5 + $0x18] sm:$0xf]
  %v383 = vld [vmem:[%s5 + $0x1c] sm:$0xf]
  %v384 = vld [vmem:[%s6] sm:$0x1]
  %v386 = vlaneseq
  %v387 = vshrl.u32 %v386, 7
  %v388 = vsub.s32 0, %v387
  %v389 = vrot.slane %v384, %v388
  %v399 = vunpack.c.l.b16 %v376
  %v400 = vunpack.c.l.b16 %v377
  %v401 = vunpack.c.l.b16 %v378
  %v402 = vunpack.c.l.b16 %v379
  %v403 = vunpack.c.l.b16 %v380
  %v404 = vunpack.c.l.b16 %v381
  %v405 = vunpack.c.l.b16 %v382
  %v406 = vunpack.c.l.b16 %v383
  %v407 = vpack.c.b16 %v400, %v399
  %v408 = vpack.c.b16 %v402, %v401
  %v409 = vpack.c.b16 %v404, %v403
  %v410 = vpack.c.b16 %v406, %v405
  %vm415 = vcmask 523264
  %v417 = vsel %vm415, %v360, 0
  %v420 = vsel %vm415, %v361, 0
  %v423 = vsel %vm415, %v362, 0
  %v426 = vsel %vm415, %v363, 0
  %v429 = vsel %vm415, %v364, 0
  %v432 = vsel %vm415, %v365, 0
  %v435 = vsel %vm415, %v366, 0
  %v438 = vsel %vm415, %v367, 0
  %v441 = vsel %vm415, %v368, 0
  %v444 = vsel %vm415, %v369, 0
  %v447 = vsel %vm415, %v370, 0
  %v450 = vsel %vm415, %v371, 0
  %v453 = vsel %vm415, %v372, 0
  %v456 = vsel %vm415, %v373, 0
  %v459 = vsel %vm415, %v374, 0
  %v462 = vsel %vm415, %v375, 0
  %464 = vmatprep.subr.bf16.mxu0 0
  %465 = vmatpush1.bf16.msra.mxu0 %v407
  %466 = vmatprep.subr.bf16.mxu0 0
  %467 = vmatpush1.bf16.msra.mxu0 %v408
  %468 = vmatprep.subr.bf16.mxu0 0
  %469 = vmatpush1.bf16.msra.mxu0 %v409
  %470 = vmatprep.subr.bf16.mxu0 0
  %471 = vmatpush1.bf16.msra.mxu0 %v410
  %472 = vmatprep.subr.bf16.mxu0 0
  %473 = vmatpush1.bf16.msra.mxu0 0
  %474 = vmatprep.subr.bf16.mxu0 0
  %475 = vmatpush1.bf16.msra.mxu0 0
  %476 = vmatprep.subr.bf16.mxu0 0
  %477 = vmatpush1.bf16.msra.mxu0 0
  %478 = vmatprep.subr.bf16.mxu0 0
  %479 = vmatpush1.bf16.msra.mxu0 0
  %480 = vmatprep.subr.bf16.mxu0 0
  %481 = vmatpush1.bf16.msra.mxu0 0
  %482 = vmatprep.subr.bf16.mxu0 0
  %483 = vmatpush1.bf16.msra.mxu0 0
  %484 = vmatprep.subr.bf16.mxu0 0
  %485 = vmatpush1.bf16.msra.mxu0 0
  %486 = vmatprep.subr.bf16.mxu0 0
  %487 = vmatpush1.bf16.msra.mxu0 0
  %488 = vmatprep.subr.bf16.mxu0 0
  %489 = vmatpush1.bf16.msra.mxu0 0
  %490 = vmatprep.subr.bf16.mxu0 0
  %491 = vmatpush1.bf16.msra.mxu0 0
  %492 = vmatprep.subr.bf16.mxu0 0
  %493 = vmatpush1.bf16.msra.mxu0 0
  %494 = vmatprep.subr.bf16.mxu0 0
  %495 = vmatpush1.bf16.msra.mxu0 0
  %496 = vmatprep.mubr.bf16.mxu0 0
  %497 = vmatmul.mubr.bf16.gmra.mrb[0].mxu0 %v417
  %v498 = vpop.f32.mrb[0].mxu0
  %v499 = vadd.f32 %v389, %v498
  %v500 = vpop.f32.mrb[0].mxu0
  %v501 = vpop.f32.mrb[0].mxu0
  %v502 = vadd.f32 %v389, %v501
  %v503 = vpop.f32.mrb[0].mxu0
  %504 = vmatprep.mubr.bf16.mxu0 0
  %505 = vmatmul.mubr.bf16.gmra.mrb[0].mxu0 %v420
  %v506 = vpop.f32.mrb[0].mxu0
  %v507 = vadd.f32 %v389, %v506
  %v508 = vpop.f32.mrb[0].mxu0
  %v509 = vpop.f32.mrb[0].mxu0
  %v510 = vadd.f32 %v389, %v509
  %v511 = vpop.f32.mrb[0].mxu0
  %512 = vmatprep.mubr.bf16.mxu0 0
  %513 = vmatmul.mubr.bf16.gmra.mrb[0].mxu0 %v423
  %v514 = vpop.f32.mrb[0].mxu0
  %v515 = vadd.f32 %v389, %v514
  %v516 = vpop.f32.mrb[0].mxu0
  %v517 = vpop.f32.mrb[0].mxu0
  %v518 = vadd.f32 %v389, %v517
  %v519 = vpop.f32.mrb[0].mxu0
  %520 = vmatprep.mubr.bf16.mxu0 0
  %521 = vmatmul.mubr.bf16.gmra.mrb[0].mxu0 %v426
  %v522 = vpop.f32.mrb[0].mxu0
  %v523 = vadd.f32 %v389, %v522
  %v524 = vpop.f32.mrb[0].mxu0
  %v525 = vpop.f32.mrb[0].mxu0
  %v526 = vadd.f32 %v389, %v525
  %v527 = vpop.f32.mrb[0].mxu0
  %528 = vmatprep.mubr.bf16.mxu0 0
  %529 = vmatmul.mubr.bf16.gmra.mrb[0].mxu0 %v429
  %v530 = vpop.f32.mrb[0].mxu0
  %v531 = vadd.f32 %v389, %v530
  %v532 = vpop.f32.mrb[0].mxu0
  %v533 = vpop.f32.mrb[0].mxu0
  %v534 = vadd.f32 %v389, %v533
  %v535 = vpop.f32.mrb[0].mxu0
  %536 = vmatprep.mubr.bf16.mxu0 0
  %537 = vmatmul.mubr.bf16.gmra.mrb[0].mxu0 %v432
  %v538 = vpop.f32.mrb[0].mxu0
  %v539 = vadd.f32 %v389, %v538
  %v540 = vpop.f32.mrb[0].mxu0
  %v541 = vpop.f32.mrb[0].mxu0
  %v542 = vadd.f32 %v389, %v541
  %v543 = vpop.f32.mrb[0].mxu0
  %544 = vmatprep.mubr.bf16.mxu0 0
  %545 = vmatmul.mubr.bf16.gmra.mrb[0].mxu0 %v435
  %v546 = vpop.f32.mrb[0].mxu0
  %v547 = vadd.f32 %v389, %v546
  %v548 = vpop.f32.mrb[0].mxu0
  %v549 = vpop.f32.mrb[0].mxu0
  %v550 = vadd.f32 %v389, %v549
  %v551 = vpop.f32.mrb[0].mxu0
  %552 = vmatprep.mubr.bf16.mxu0 0
  %553 = vmatmul.mubr.bf16.gmra.mrb[0].mxu0 %v438
  %v554 = vpop.f32.mrb[0].mxu0
  %v555 = vadd.f32 %v389, %v554
  %v556 = vpop.f32.mrb[0].mxu0
  %v557 = vpop.f32.mrb[0].mxu0
  %v558 = vadd.f32 %v389, %v557
  %v559 = vpop.f32.mrb[0].mxu0
  %560 = vmatprep.mubr.bf16.mxu0 0
  %561 = vmatmul.mubr.bf16.gmra.mrb[0].mxu0 %v441
  %v562 = vpop.f32.mrb[0].mxu0
  %v563 = vadd.f32 %v389, %v562
  %v564 = vpop.f32.mrb[0].mxu0
  %v565 = vpop.f32.mrb[0].mxu0
  %v566 = vadd.f32 %v389, %v565
  %v567 = vpop.f32.mrb[0].mxu0
  %568 = vmatprep.mubr.bf16.mxu0 0
  %569 = vmatmul.mubr.bf16.gmra.mrb[0].mxu0 %v444
  %v570 = vpop.f32.mrb[0].mxu0
  %v571 = vadd.f32 %v389, %v570
  %v572 = vpop.f32.mrb[0].mxu0
  %v573 = vpop.f32.mrb[0].mxu0
  %v574 = vadd.f32 %v389, %v573
  %v575 = vpop.f32.mrb[0].mxu0
  %576 = vmatprep.mubr.bf16.mxu0 0
  %577 = vmatmul.mubr.bf16.gmra.mrb[0].mxu0 %v447
  %v578 = vpop.f32.mrb[0].mxu0
  %v579 = vadd.f32 %v389, %v578
  %v580 = vpop.f32.mrb[0].mxu0
  %v581 = vpop.f32.mrb[0].mxu0
  %v582 = vadd.f32 %v389, %v581
  %v583 = vpop.f32.mrb[0].mxu0
  %584 = vmatprep.mubr.bf16.mxu0 0
  %585 = vmatmul.mubr.bf16.gmra.mrb[0].mxu0 %v450
  %v586 = vpop.f32.mrb[0].mxu0
  %v587 = vadd.f32 %v389, %v586
  %v588 = vpop.f32.mrb[0].mxu0
  %v589 = vpop.f32.mrb[0].mxu0
  %v590 = vadd.f32 %v389, %v589
  %v591 = vpop.f32.mrb[0].mxu0
  %592 = vmatprep.mubr.bf16.mxu0 0
  %593 = vmatmul.mubr.bf16.gmra.mrb[0].mxu0 %v453
  %v594 = vpop.f32.mrb[0].mxu0
  %v595 = vadd.f32 %v389, %v594
  %v596 = vpop.f32.mrb[0].mxu0
  %v597 = vpop.f32.mrb[0].mxu0
  %v598 = vadd.f32 %v389, %v597
  %v599 = vpop.f32.mrb[0].mxu0
  %600 = vmatprep.mubr.bf16.mxu0 0
  %601 = vmatmul.mubr.bf16.gmra.mrb[0].mxu0 %v456
  %v602 = vpop.f32.mrb[0].mxu0
  %v603 = vadd.f32 %v389, %v602
  %v604 = vpop.f32.mrb[0].mxu0
  %v605 = vpop.f32.mrb[0].mxu0
  %v606 = vadd.f32 %v389, %v605
  %v607 = vpop.f32.mrb[0].mxu0
  %608 = vmatprep.mubr.bf16.mxu0 0
  %609 = vmatmul.mubr.bf16.gmra.mrb[0].mxu0 %v459
  %v610 = vpop.f32.mrb[0].mxu0
  %v611 = vadd.f32 %v389, %v610
  %v612 = vpop.f32.mrb[0].mxu0
  %v613 = vpop.f32.mrb[0].mxu0
  %v614 = vadd.f32 %v389, %v613
  %v615 = vpop.f32.mrb[0].mxu0
  %616 = vmatprep.mubr.bf16.mxu0 0
  %617 = vmatmul.mubr.bf16.gmra.mrb[0].mxu0 %v462
  %v618 = vpop.f32.mrb[0].mxu0
  %v619 = vadd.f32 %v389, %v618
  %v620 = vpop.f32.mrb[0].mxu0
  %v621 = vpop.f32.mrb[0].mxu0
  %v622 = vadd.f32 %v389, %v621
  %v623 = vpop.f32.mrb[0].mxu0
  %624 = vdwg.mxu0
  %v625 = vmax.f32 %v499, 0.0
  %v626 = vmax.f32 %v502, 0.0
  %v627 = vmax.f32 %v507, 0.0
  %v628 = vmax.f32 %v510, 0.0
  %v629 = vmax.f32 %v515, 0.0
  %v630 = vmax.f32 %v518, 0.0
  %v631 = vmax.f32 %v523, 0.0
  %v632 = vmax.f32 %v526, 0.0
  %v633 = vmax.f32 %v531, 0.0
  %v634 = vmax.f32 %v534, 0.0
  %v635 = vmax.f32 %v539, 0.0
  %v636 = vmax.f32 %v542, 0.0
  %v637 = vmax.f32 %v547, 0.0
  %v638 = vmax.f32 %v550, 0.0
  %v639 = vmax.f32 %v555, 0.0
  %v640 = vmax.f32 %v558, 0.0
  %v641 = vmax.f32 %v563, 0.0
  %v642 = vmax.f32 %v566, 0.0
  %v643 = vmax.f32 %v571, 0.0
  %v644 = vmax.f32 %v574, 0.0
  %v645 = vmax.f32 %v579, 0.0
  %v646 = vmax.f32 %v582, 0.0
  %v647 = vmax.f32 %v587, 0.0
  %v648 = vmax.f32 %v590, 0.0
  %v649 = vmax.f32 %v595, 0.0
  %v650 = vmax.f32 %v598, 0.0
  %v651 = vmax.f32 %v603, 0.0
  %v652 = vmax.f32 %v606, 0.0
  %v653 = vmax.f32 %v611, 0.0
  %v654 = vmax.f32 %v614, 0.0
  %v655 = vmax.f32 %v619, 0.0
  %v656 = vmax.f32 %v622, 0.0
  %v657 = vpack.c.bf16 %v626, %v625
  %v658 = vpack.c.bf16 %v628, %v627
  %v659 = vpack.c.bf16 %v630, %v629
  %v660 = vpack.c.bf16 %v632, %v631
  %v661 = vpack.c.bf16 %v634, %v633
  %v662 = vpack.c.bf16 %v636, %v635
  %v663 = vpack.c.bf16 %v638, %v637
  %v664 = vpack.c.bf16 %v640, %v639
  %v665 = vpack.c.bf16 %v642, %v641
  %v666 = vpack.c.bf16 %v644, %v643
  %v667 = vpack.c.bf16 %v646, %v645
  %v668 = vpack.c.bf16 %v648, %v647
  %v669 = vpack.c.bf16 %v650, %v649
  %v670 = vpack.c.bf16 %v652, %v651
  %v671 = vpack.c.bf16 %v654, %v653
  %v672 = vpack.c.bf16 %v656, %v655
  %v673 = vld [vmem:[%s7] sm:$0xf]
  %v674 = vld [vmem:[%s7 + $0x4] sm:$0xf]
  %v675 = vld [vmem:[%s7 + $0x8] sm:$0xf]
  %v676 = vld [vmem:[%s7 + $0xc] sm:$0xf]
  %v677 = vld [vmem:[%s7 + $0x10] sm:$0xf]
  %v678 = vld [vmem:[%s7 + $0x14] sm:$0xf]
  %v679 = vld [vmem:[%s7 + $0x18] sm:$0xf]
  %v680 = vld [vmem:[%s7 + $0x1c] sm:$0xf]
  %v681 = vld [vmem:[%s1] sm:$0xff]
  %v682 = vld [vmem:[%s1 + $0x8] sm:$0xff]
  %v683 = vld [vmem:[%s1 + $0x10] sm:$0xff]
  %v684 = vld [vmem:[%s1 + $0x18] sm:$0xff]
  %v685 = vld [vmem:[%s1 + $0x20] sm:$0xff]
  %v686 = vld [vmem:[%s1 + $0x28] sm:$0xff]
  %v687 = vld [vmem:[%s1 + $0x30] sm:$0xff]
  %v688 = vld [vmem:[%s1 + $0x38] sm:$0xff]
  %v689 = vld [vmem:[%s1 + $0x40] sm:$0xff]
  %v690 = vld [vmem:[%s1 + $0x48] sm:$0xff]
  %v691 = vld [vmem:[%s1 + $0x50] sm:$0xff]
  %v692 = vld [vmem:[%s1 + $0x58] sm:$0xff]
  %v693 = vld [vmem:[%s1 + $0x60] sm:$0xff]
  %v694 = vld [vmem:[%s1 + $0x68] sm:$0xff]
  %v695 = vld [vmem:[%s1 + $0x70] sm:$0xff]
  %v696 = vld [vmem:[%s1 + $0x78] sm:$0xff]
  %v697 = vld [vmem:[%s1 + $0x80] sm:$0xff]
  %v698 = vld [vmem:[%s1 + $0x88] sm:$0xff]
  %v699 = vld [vmem:[%s1 + $0x90] sm:$0xff]
  %v700 = vld [vmem:[%s1 + $0x98] sm:$0xff]
  %v701 = vld [vmem:[%s1 + $0xa0] sm:$0xff]
  %v702 = vld [vmem:[%s1 + $0xa8] sm:$0xff]
  %v703 = vld [vmem:[%s1 + $0xb0] sm:$0xff]
  %v704 = vld [vmem:[%s1 + $0xb8] sm:$0xff]
  %v705 = vld [vmem:[%s1 + $0xc0] sm:$0xff]
  %v706 = vld [vmem:[%s1 + $0xc8] sm:$0xff]
  %v707 = vld [vmem:[%s1 + $0xd0] sm:$0xff]
  %v708 = vld [vmem:[%s1 + $0xd8] sm:$0xff]
  %v709 = vld [vmem:[%s1 + $0xe0] sm:$0xff]
  %v710 = vld [vmem:[%s1 + $0xe8] sm:$0xff]
  %v711 = vld [vmem:[%s1 + $0xf0] sm:$0xff]
  %v712 = vld [vmem:[%s1 + $0xf8] sm:$0xff]
  %v713 = vld [vmem:[%s8] sm:$0xf]
  %v714 = vld [vmem:[%s9] sm:$0x1]
  %716 = vset.pattern.permute.xlu0 0
  %717 = vperm.xlu0 %716, %v681
  %v718 = vpop.permute.xlu0 %717
  %721 = vset.pattern.permute.xlu0 0
  %722 = vperm.xlu0 %721, %v682
  %v723 = vpop.permute.xlu0 %722
  %726 = vset.pattern.permute.xlu0 0
  %727 = vperm.xlu0 %726, %v683
  %v728 = vpop.permute.xlu0 %727
  %731 = vset.pattern.permute.xlu0 0
  %732 = vperm.xlu0 %731, %v684
  %v733 = vpop.permute.xlu0 %732
  %736 = vset.pattern.permute.xlu0 0
  %737 = vperm.xlu0 %736, %v685
  %v738 = vpop.permute.xlu0 %737
  %741 = vset.pattern.permute.xlu0 0
  %742 = vperm.xlu0 %741, %v686
  %v743 = vpop.permute.xlu0 %742
  %746 = vset.pattern.permute.xlu0 0
  %747 = vperm.xlu0 %746, %v687
  %v748 = vpop.permute.xlu0 %747
  %751 = vset.pattern.permute.xlu0 0
  %752 = vperm.xlu0 %751, %v688
  %v753 = vpop.permute.xlu0 %752
  %756 = vset.pattern.permute.xlu0 0
  %757 = vperm.xlu0 %756, %v689
  %v758 = vpop.permute.xlu0 %757
  %761 = vset.pattern.permute.xlu0 0
  %762 = vperm.xlu0 %761, %v690
  %v763 = vpop.permute.xlu0 %762
  %766 = vset.pattern.permute.xlu0 0
  %767 = vperm.xlu0 %766, %v691
  %v768 = vpop.permute.xlu0 %767
  %771 = vset.pattern.permute.xlu0 0
  %772 = vperm.xlu0 %771, %v692
  %v773 = vpop.permute.xlu0 %772
  %776 = vset.pattern.permute.xlu0 0
  %777 = vperm.xlu0 %776, %v693
  %v778 = vpop.permute.xlu0 %777
  %781 = vset.pattern.permute.xlu0 0
  %782 = vperm.xlu0 %781, %v694
  %v783 = vpop.permute.xlu0 %782
  %786 = vset.pattern.permute.xlu0 0
  %787 = vperm.xlu0 %786, %v695
  %v788 = vpop.permute.xlu0 %787
  %791 = vset.pattern.permute.xlu0 0
  %792 = vperm.xlu0 %791, %v696
  %v793 = vpop.permute.xlu0 %792
  %796 = vset.pattern.permute.xlu0 0
  %797 = vperm.xlu0 %796, %v697
  %v798 = vpop.permute.xlu0 %797
  %801 = vset.pattern.permute.xlu0 0
  %802 = vperm.xlu0 %801, %v698
  %v803 = vpop.permute.xlu0 %802
  %806 = vset.pattern.permute.xlu0 0
  %807 = vperm.xlu0 %806, %v699
  %v808 = vpop.permute.xlu0 %807
  %811 = vset.pattern.permute.xlu0 0
  %812 = vperm.xlu0 %811, %v700
  %v813 = vpop.permute.xlu0 %812
  %816 = vset.pattern.permute.xlu0 0
  %817 = vperm.xlu0 %816, %v701
  %v818 = vpop.permute.xlu0 %817
  %821 = vset.pattern.permute.xlu0 0
  %822 = vperm.xlu0 %821, %v702
  %v823 = vpop.permute.xlu0 %822
  %826 = vset.pattern.permute.xlu0 0
  %827 = vperm.xlu0 %826, %v703
  %v828 = vpop.permute.xlu0 %827
  %831 = vset.pattern.permute.xlu0 0
  %832 = vperm.xlu0 %831, %v704
  %v833 = vpop.permute.xlu0 %832
  %836 = vset.pattern.permute.xlu0 0
  %837 = vperm.xlu0 %836, %v705
  %v838 = vpop.permute.xlu0 %837
  %841 = vset.pattern.permute.xlu0 0
  %842 = vperm.xlu0 %841, %v706
  %v843 = vpop.permute.xlu0 %842
  %846 = vset.pattern.permute.xlu0 0
  %847 = vperm.xlu0 %846, %v707
  %v848 = vpop.permute.xlu0 %847
  %851 = vset.pattern.permute.xlu0 0
  %852 = vperm.xlu0 %851, %v708
  %v853 = vpop.permute.xlu0 %852
  %856 = vset.pattern.permute.xlu0 0
  %857 = vperm.xlu0 %856, %v709
  %v858 = vpop.permute.xlu0 %857
  %861 = vset.pattern.permute.xlu0 0
  %862 = vperm.xlu0 %861, %v710
  %v863 = vpop.permute.xlu0 %862
  %866 = vset.pattern.permute.xlu0 0
  %867 = vperm.xlu0 %866, %v711
  %v868 = vpop.permute.xlu0 %867
  %871 = vset.pattern.permute.xlu0 0
  %872 = vperm.xlu0 %871, %v712
  %v873 = vpop.permute.xlu0 %872
  %v875 = vlaneseq
  %v876 = vshrl.u32 %v875, 7
  %v877 = vsub.s32 0, %v876
  %v878 = vrot.slane %v713, %v877
  %v879 = vmul.f32 %v718, %v878
  %v880 = vmul.f32 %v723, %v878
  %v881 = vmul.f32 %v728, %v878
  %v882 = vmul.f32 %v733, %v878
  %v883 = vmul.f32 %v738, %v878
  %v884 = vmul.f32 %v743, %v878
  %v885 = vmul.f32 %v748, %v878
  %v886 = vmul.f32 %v753, %v878
  %v887 = vmul.f32 %v758, %v878
  %v888 = vmul.f32 %v763, %v878
  %v889 = vmul.f32 %v768, %v878
  %v890 = vmul.f32 %v773, %v878
  %v891 = vmul.f32 %v778, %v878
  %v892 = vmul.f32 %v783, %v878
  %v893 = vmul.f32 %v788, %v878
  %v894 = vmul.f32 %v793, %v878
  %v895 = vmul.f32 %v798, %v878
  %v896 = vmul.f32 %v803, %v878
  %v897 = vmul.f32 %v808, %v878
  %v898 = vmul.f32 %v813, %v878
  %v899 = vmul.f32 %v818, %v878
  %v900 = vmul.f32 %v823, %v878
  %v901 = vmul.f32 %v828, %v878
  %v902 = vmul.f32 %v833, %v878
  %v903 = vmul.f32 %v838, %v878
  %v904 = vmul.f32 %v843, %v878
  %v905 = vmul.f32 %v848, %v878
  %v906 = vmul.f32 %v853, %v878
  %v907 = vmul.f32 %v858, %v878
  %v908 = vmul.f32 %v863, %v878
  %v909 = vmul.f32 %v868, %v878
  %v910 = vmul.f32 %v873, %v878
  %v912 = vlaneseq
  %v913 = vshrl.u32 %v912, 7
  %v914 = vsub.s32 0, %v913
  %v915 = vrot.slane %v714, %v914
  %v917 = vadd.f32 %v915, %v879
  %v918 = vadd.f32 %v915, %v880
  %v919 = vadd.f32 %v915, %v881
  %v920 = vadd.f32 %v915, %v882
  %v921 = vadd.f32 %v915, %v883
  %v922 = vadd.f32 %v915, %v884
  %v923 = vadd.f32 %v915, %v885
  %v924 = vadd.f32 %v915, %v886
  %v925 = vadd.f32 %v915, %v887
  %v926 = vadd.f32 %v915, %v888
  %v927 = vadd.f32 %v915, %v889
  %v928 = vadd.f32 %v915, %v890
  %v929 = vadd.f32 %v915, %v891
  %v930 = vadd.f32 %v915, %v892
  %v931 = vadd.f32 %v915, %v893
  %v932 = vadd.f32 %v915, %v894
  %v933 = vadd.f32 %v915, %v895
  %v934 = vadd.f32 %v915, %v896
  %v935 = vadd.f32 %v915, %v897
  %v936 = vadd.f32 %v915, %v898
  %v937 = vadd.f32 %v915, %v899
  %v938 = vadd.f32 %v915, %v900
  %v939 = vadd.f32 %v915, %v901
  %v940 = vadd.f32 %v915, %v902
  %v941 = vadd.f32 %v915, %v903
  %v942 = vadd.f32 %v915, %v904
  %v943 = vadd.f32 %v915, %v905
  %v944 = vadd.f32 %v915, %v906
  %v945 = vadd.f32 %v915, %v907
  %v946 = vadd.f32 %v915, %v908
  %v947 = vadd.f32 %v915, %v909
  %v948 = vadd.f32 %v915, %v910
  %949 = vset.pattern.permute.xlu0 1
  %950 = vperm.xlu0 %949, %v681
  %v951 = vpop.permute.xlu0 %950
  %953 = vset.pattern.permute.xlu0 1
  %954 = vperm.xlu0 %953, %v682
  %v955 = vpop.permute.xlu0 %954
  %957 = vset.pattern.permute.xlu0 1
  %958 = vperm.xlu0 %957, %v683
  %v959 = vpop.permute.xlu0 %958
  %961 = vset.pattern.permute.xlu0 1
  %962 = vperm.xlu0 %961, %v684
  %v963 = vpop.permute.xlu0 %962
  %965 = vset.pattern.permute.xlu0 1
  %966 = vperm.xlu0 %965, %v685
  %v967 = vpop.permute.xlu0 %966
  %969 = vset.pattern.permute.xlu0 1
  %970 = vperm.xlu0 %969, %v686
  %v971 = vpop.permute.xlu0 %970
  %973 = vset.pattern.permute.xlu0 1
  %974 = vperm.xlu0 %973, %v687
  %v975 = vpop.permute.xlu0 %974
  %977 = vset.pattern.permute.xlu0 1
  %978 = vperm.xlu0 %977, %v688
  %v979 = vpop.permute.xlu0 %978
  %981 = vset.pattern.permute.xlu0 1
  %982 = vperm.xlu0 %981, %v689
  %v983 = vpop.permute.xlu0 %982
  %985 = vset.pattern.permute.xlu0 1
  %986 = vperm.xlu0 %985, %v690
  %v987 = vpop.permute.xlu0 %986
  %989 = vset.pattern.permute.xlu0 1
  %990 = vperm.xlu0 %989, %v691
  %v991 = vpop.permute.xlu0 %990
  %993 = vset.pattern.permute.xlu0 1
  %994 = vperm.xlu0 %993, %v692
  %v995 = vpop.permute.xlu0 %994
  %997 = vset.pattern.permute.xlu0 1
  %998 = vperm.xlu0 %997, %v693
  %v999 = vpop.permute.xlu0 %998
  %1001 = vset.pattern.permute.xlu0 1
  %1002 = vperm.xlu0 %1001, %v694
  %v1003 = vpop.permute.xlu0 %1002
  %1005 = vset.pattern.permute.xlu0 1
  %1006 = vperm.xlu0 %1005, %v695
  %v1007 = vpop.permute.xlu0 %1006
  %1009 = vset.pattern.permute.xlu0 1
  %1010 = vperm.xlu0 %1009, %v696
  %v1011 = vpop.permute.xlu0 %1010
  %1013 = vset.pattern.permute.xlu0 1
  %1014 = vperm.xlu0 %1013, %v697
  %v1015 = vpop.permute.xlu0 %1014
  %1017 = vset.pattern.permute.xlu0 1
  %1018 = vperm.xlu0 %1017, %v698
  %v1019 = vpop.permute.xlu0 %1018
  %1021 = vset.pattern.permute.xlu0 1
  %1022 = vperm.xlu0 %1021, %v699
  %v1023 = vpop.permute.xlu0 %1022
  %1025 = vset.pattern.permute.xlu0 1
  %1026 = vperm.xlu0 %1025, %v700
  %v1027 = vpop.permute.xlu0 %1026
  %1029 = vset.pattern.permute.xlu0 1
  %1030 = vperm.xlu0 %1029, %v701
  %v1031 = vpop.permute.xlu0 %1030
  %1033 = vset.pattern.permute.xlu0 1
  %1034 = vperm.xlu0 %1033, %v702
  %v1035 = vpop.permute.xlu0 %1034
  %1037 = vset.pattern.permute.xlu0 1
  %1038 = vperm.xlu0 %1037, %v703
  %v1039 = vpop.permute.xlu0 %1038
  %1041 = vset.pattern.permute.xlu0 1
  %1042 = vperm.xlu0 %1041, %v704
  %v1043 = vpop.permute.xlu0 %1042
  %1045 = vset.pattern.permute.xlu0 1
  %1046 = vperm.xlu0 %1045, %v705
  %v1047 = vpop.permute.xlu0 %1046
  %1049 = vset.pattern.permute.xlu0 1
  %1050 = vperm.xlu0 %1049, %v706
  %v1051 = vpop.permute.xlu0 %1050
  %1053 = vset.pattern.permute.xlu0 1
  %1054 = vperm.xlu0 %1053, %v707
  %v1055 = vpop.permute.xlu0 %1054
  %1057 = vset.pattern.permute.xlu0 1
  %1058 = vperm.xlu0 %1057, %v708
  %v1059 = vpop.permute.xlu0 %1058
  %1061 = vset.pattern.permute.xlu0 1
  %1062 = vperm.xlu0 %1061, %v709
  %v1063 = vpop.permute.xlu0 %1062
  %1065 = vset.pattern.permute.xlu0 1
  %1066 = vperm.xlu0 %1065, %v710
  %v1067 = vpop.permute.xlu0 %1066
  %1069 = vset.pattern.permute.xlu0 1
  %1070 = vperm.xlu0 %1069, %v711
  %v1071 = vpop.permute.xlu0 %1070
  %1073 = vset.pattern.permute.xlu0 1
  %1074 = vperm.xlu0 %1073, %v712
  %v1075 = vpop.permute.xlu0 %1074
  %v1077 = vlaneseq
  %v1078 = vshrl.u32 %v1077, 7
  %v1079 = vsub.s32 1, %v1078
  %v1080 = vrot.slane %v713, %v1079
  %v1081 = vmul.f32 %v951, %v1080
  %v1082 = vmul.f32 %v955, %v1080
  %v1083 = vmul.f32 %v959, %v1080
  %v1084 = vmul.f32 %v963, %v1080
  %v1085 = vmul.f32 %v967, %v1080
  %v1086 = vmul.f32 %v971, %v1080
  %v1087 = vmul.f32 %v975, %v1080
  %v1088 = vmul.f32 %v979, %v1080
  %v1089 = vmul.f32 %v983, %v1080
  %v1090 = vmul.f32 %v987, %v1080
  %v1091 = vmul.f32 %v991, %v1080
  %v1092 = vmul.f32 %v995, %v1080
  %v1093 = vmul.f32 %v999, %v1080
  %v1094 = vmul.f32 %v1003, %v1080
  %v1095 = vmul.f32 %v1007, %v1080
  %v1096 = vmul.f32 %v1011, %v1080
  %v1097 = vmul.f32 %v1015, %v1080
  %v1098 = vmul.f32 %v1019, %v1080
  %v1099 = vmul.f32 %v1023, %v1080
  %v1100 = vmul.f32 %v1027, %v1080
  %v1101 = vmul.f32 %v1031, %v1080
  %v1102 = vmul.f32 %v1035, %v1080
  %v1103 = vmul.f32 %v1039, %v1080
  %v1104 = vmul.f32 %v1043, %v1080
  %v1105 = vmul.f32 %v1047, %v1080
  %v1106 = vmul.f32 %v1051, %v1080
  %v1107 = vmul.f32 %v1055, %v1080
  %v1108 = vmul.f32 %v1059, %v1080
  %v1109 = vmul.f32 %v1063, %v1080
  %v1110 = vmul.f32 %v1067, %v1080
  %v1111 = vmul.f32 %v1071, %v1080
  %v1112 = vmul.f32 %v1075, %v1080
  %v1113 = vadd.f32 %v917, %v1081
  %v1114 = vadd.f32 %v918, %v1082
  %v1115 = vadd.f32 %v919, %v1083
  %v1116 = vadd.f32 %v920, %v1084
  %v1117 = vadd.f32 %v921, %v1085
  %v1118 = vadd.f32 %v922, %v1086
  %v1119 = vadd.f32 %v923, %v1087
  %v1120 = vadd.f32 %v924, %v1088
  %v1121 = vadd.f32 %v925, %v1089
  %v1122 = vadd.f32 %v926, %v1090
  %v1123 = vadd.f32 %v927, %v1091
  %v1124 = vadd.f32 %v928, %v1092
  %v1125 = vadd.f32 %v929, %v1093
  %v1126 = vadd.f32 %v930, %v1094
  %v1127 = vadd.f32 %v931, %v1095
  %v1128 = vadd.f32 %v932, %v1096
  %v1129 = vadd.f32 %v933, %v1097
  %v1130 = vadd.f32 %v934, %v1098
  %v1131 = vadd.f32 %v935, %v1099
  %v1132 = vadd.f32 %v936, %v1100
  %v1133 = vadd.f32 %v937, %v1101
  %v1134 = vadd.f32 %v938, %v1102
  %v1135 = vadd.f32 %v939, %v1103
  %v1136 = vadd.f32 %v940, %v1104
  %v1137 = vadd.f32 %v941, %v1105
  %v1138 = vadd.f32 %v942, %v1106
  %v1139 = vadd.f32 %v943, %v1107
  %v1140 = vadd.f32 %v944, %v1108
  %v1141 = vadd.f32 %v945, %v1109
  %v1142 = vadd.f32 %v946, %v1110
  %v1143 = vadd.f32 %v947, %v1111
  %v1144 = vadd.f32 %v948, %v1112
  %1145 = vset.pattern.permute.xlu0 2
  %1146 = vperm.xlu0 %1145, %v681
  %v1147 = vpop.permute.xlu0 %1146
  %1149 = vset.pattern.permute.xlu0 2
  %1150 = vperm.xlu0 %1149, %v682
  %v1151 = vpop.permute.xlu0 %1150
  %1153 = vset.pattern.permute.xlu0 2
  %1154 = vperm.xlu0 %1153, %v683
  %v1155 = vpop.permute.xlu0 %1154
  %1157 = vset.pattern.permute.xlu0 2
  %1158 = vperm.xlu0 %1157, %v684
  %v1159 = vpop.permute.xlu0 %1158
  %1161 = vset.pattern.permute.xlu0 2
  %1162 = vperm.xlu0 %1161, %v685
  %v1163 = vpop.permute.xlu0 %1162
  %1165 = vset.pattern.permute.xlu0 2
  %1166 = vperm.xlu0 %1165, %v686
  %v1167 = vpop.permute.xlu0 %1166
  %1169 = vset.pattern.permute.xlu0 2
  %1170 = vperm.xlu0 %1169, %v687
  %v1171 = vpop.permute.xlu0 %1170
  %1173 = vset.pattern.permute.xlu0 2
  %1174 = vperm.xlu0 %1173, %v688
  %v1175 = vpop.permute.xlu0 %1174
  %1177 = vset.pattern.permute.xlu0 2
  %1178 = vperm.xlu0 %1177, %v689
  %v1179 = vpop.permute.xlu0 %1178
  %1181 = vset.pattern.permute.xlu0 2
  %1182 = vperm.xlu0 %1181, %v690
  %v1183 = vpop.permute.xlu0 %1182
  %1185 = vset.pattern.permute.xlu0 2
  %1186 = vperm.xlu0 %1185, %v691
  %v1187 = vpop.permute.xlu0 %1186
  %1189 = vset.pattern.permute.xlu0 2
  %1190 = vperm.xlu0 %1189, %v692
  %v1191 = vpop.permute.xlu0 %1190
  %1193 = vset.pattern.permute.xlu0 2
  %1194 = vperm.xlu0 %1193, %v693
  %v1195 = vpop.permute.xlu0 %1194
  %1197 = vset.pattern.permute.xlu0 2
  %1198 = vperm.xlu0 %1197, %v694
  %v1199 = vpop.permute.xlu0 %1198
  %1201 = vset.pattern.permute.xlu0 2
  %1202 = vperm.xlu0 %1201, %v695
  %v1203 = vpop.permute.xlu0 %1202
  %1205 = vset.pattern.permute.xlu0 2
  %1206 = vperm.xlu0 %1205, %v696
  %v1207 = vpop.permute.xlu0 %1206
  %1209 = vset.pattern.permute.xlu0 2
  %1210 = vperm.xlu0 %1209, %v697
  %v1211 = vpop.permute.xlu0 %1210
  %1213 = vset.pattern.permute.xlu0 2
  %1214 = vperm.xlu0 %1213, %v698
  %v1215 = vpop.permute.xlu0 %1214
  %1217 = vset.pattern.permute.xlu0 2
  %1218 = vperm.xlu0 %1217, %v699
  %v1219 = vpop.permute.xlu0 %1218
  %1221 = vset.pattern.permute.xlu0 2
  %1222 = vperm.xlu0 %1221, %v700
  %v1223 = vpop.permute.xlu0 %1222
  %1225 = vset.pattern.permute.xlu0 2
  %1226 = vperm.xlu0 %1225, %v701
  %v1227 = vpop.permute.xlu0 %1226
  %1229 = vset.pattern.permute.xlu0 2
  %1230 = vperm.xlu0 %1229, %v702
  %v1231 = vpop.permute.xlu0 %1230
  %1233 = vset.pattern.permute.xlu0 2
  %1234 = vperm.xlu0 %1233, %v703
  %v1235 = vpop.permute.xlu0 %1234
  %1237 = vset.pattern.permute.xlu0 2
  %1238 = vperm.xlu0 %1237, %v704
  %v1239 = vpop.permute.xlu0 %1238
  %1241 = vset.pattern.permute.xlu0 2
  %1242 = vperm.xlu0 %1241, %v705
  %v1243 = vpop.permute.xlu0 %1242
  %1245 = vset.pattern.permute.xlu0 2
  %1246 = vperm.xlu0 %1245, %v706
  %v1247 = vpop.permute.xlu0 %1246
  %1249 = vset.pattern.permute.xlu0 2
  %1250 = vperm.xlu0 %1249, %v707
  %v1251 = vpop.permute.xlu0 %1250
  %1253 = vset.pattern.permute.xlu0 2
  %1254 = vperm.xlu0 %1253, %v708
  %v1255 = vpop.permute.xlu0 %1254
  %1257 = vset.pattern.permute.xlu0 2
  %1258 = vperm.xlu0 %1257, %v709
  %v1259 = vpop.permute.xlu0 %1258
  %1261 = vset.pattern.permute.xlu0 2
  %1262 = vperm.xlu0 %1261, %v710
  %v1263 = vpop.permute.xlu0 %1262
  %1265 = vset.pattern.permute.xlu0 2
  %1266 = vperm.xlu0 %1265, %v711
  %v1267 = vpop.permute.xlu0 %1266
  %1269 = vset.pattern.permute.xlu0 2
  %1270 = vperm.xlu0 %1269, %v712
  %v1271 = vpop.permute.xlu0 %1270
  %v1273 = vlaneseq
  %v1274 = vshrl.u32 %v1273, 7
  %v1275 = vsub.s32 2, %v1274
  %v1276 = vrot.slane %v713, %v1275
  %v1277 = vmul.f32 %v1147, %v1276
  %v1278 = vmul.f32 %v1151, %v1276
  %v1279 = vmul.f32 %v1155, %v1276
  %v1280 = vmul.f32 %v1159, %v1276
  %v1281 = vmul.f32 %v1163, %v1276
  %v1282 = vmul.f32 %v1167, %v1276
  %v1283 = vmul.f32 %v1171, %v1276
  %v1284 = vmul.f32 %v1175, %v1276
  %v1285 = vmul.f32 %v1179, %v1276
  %v1286 = vmul.f32 %v1183, %v1276
  %v1287 = vmul.f32 %v1187, %v1276
  %v1288 = vmul.f32 %v1191, %v1276
  %v1289 = vmul.f32 %v1195, %v1276
  %v1290 = vmul.f32 %v1199, %v1276
  %v1291 = vmul.f32 %v1203, %v1276
  %v1292 = vmul.f32 %v1207, %v1276
  %v1293 = vmul.f32 %v1211, %v1276
  %v1294 = vmul.f32 %v1215, %v1276
  %v1295 = vmul.f32 %v1219, %v1276
  %v1296 = vmul.f32 %v1223, %v1276
  %v1297 = vmul.f32 %v1227, %v1276
  %v1298 = vmul.f32 %v1231, %v1276
  %v1299 = vmul.f32 %v1235, %v1276
  %v1300 = vmul.f32 %v1239, %v1276
  %v1301 = vmul.f32 %v1243, %v1276
  %v1302 = vmul.f32 %v1247, %v1276
  %v1303 = vmul.f32 %v1251, %v1276
  %v1304 = vmul.f32 %v1255, %v1276
  %v1305 = vmul.f32 %v1259, %v1276
  %v1306 = vmul.f32 %v1263, %v1276
  %v1307 = vmul.f32 %v1267, %v1276
  %v1308 = vmul.f32 %v1271, %v1276
  %v1309 = vadd.f32 %v1113, %v1277
  %v1310 = vadd.f32 %v1114, %v1278
  %v1311 = vadd.f32 %v1115, %v1279
  %v1312 = vadd.f32 %v1116, %v1280
  %v1313 = vadd.f32 %v1117, %v1281
  %v1314 = vadd.f32 %v1118, %v1282
  %v1315 = vadd.f32 %v1119, %v1283
  %v1316 = vadd.f32 %v1120, %v1284
  %v1317 = vadd.f32 %v1121, %v1285
  %v1318 = vadd.f32 %v1122, %v1286
  %v1319 = vadd.f32 %v1123, %v1287
  %v1320 = vadd.f32 %v1124, %v1288
  %v1321 = vadd.f32 %v1125, %v1289
  %v1322 = vadd.f32 %v1126, %v1290
  %v1323 = vadd.f32 %v1127, %v1291
  %v1324 = vadd.f32 %v1128, %v1292
  %v1325 = vadd.f32 %v1129, %v1293
  %v1326 = vadd.f32 %v1130, %v1294
  %v1327 = vadd.f32 %v1131, %v1295
  %v1328 = vadd.f32 %v1132, %v1296
  %v1329 = vadd.f32 %v1133, %v1297
  %v1330 = vadd.f32 %v1134, %v1298
  %v1331 = vadd.f32 %v1135, %v1299
  %v1332 = vadd.f32 %v1136, %v1300
  %v1333 = vadd.f32 %v1137, %v1301
  %v1334 = vadd.f32 %v1138, %v1302
  %v1335 = vadd.f32 %v1139, %v1303
  %v1336 = vadd.f32 %v1140, %v1304
  %v1337 = vadd.f32 %v1141, %v1305
  %v1338 = vadd.f32 %v1142, %v1306
  %v1339 = vadd.f32 %v1143, %v1307
  %v1340 = vadd.f32 %v1144, %v1308
  %1341 = vset.pattern.permute.xlu0 3
  %1342 = vperm.xlu0 %1341, %v681
  %v1343 = vpop.permute.xlu0 %1342
  %1345 = vset.pattern.permute.xlu0 3
  %1346 = vperm.xlu0 %1345, %v682
  %v1347 = vpop.permute.xlu0 %1346
  %1349 = vset.pattern.permute.xlu0 3
  %1350 = vperm.xlu0 %1349, %v683
  %v1351 = vpop.permute.xlu0 %1350
  %1353 = vset.pattern.permute.xlu0 3
  %1354 = vperm.xlu0 %1353, %v684
  %v1355 = vpop.permute.xlu0 %1354
  %1357 = vset.pattern.permute.xlu0 3
  %1358 = vperm.xlu0 %1357, %v685
  %v1359 = vpop.permute.xlu0 %1358
  %1361 = vset.pattern.permute.xlu0 3
  %1362 = vperm.xlu0 %1361, %v686
  %v1363 = vpop.permute.xlu0 %1362
  %1365 = vset.pattern.permute.xlu0 3
  %1366 = vperm.xlu0 %1365, %v687
  %v1367 = vpop.permute.xlu0 %1366
  %1369 = vset.pattern.permute.xlu0 3
  %1370 = vperm.xlu0 %1369, %v688
  %v1371 = vpop.permute.xlu0 %1370
  %1373 = vset.pattern.permute.xlu0 3
  %1374 = vperm.xlu0 %1373, %v689
  %v1375 = vpop.permute.xlu0 %1374
  %1377 = vset.pattern.permute.xlu0 3
  %1378 = vperm.xlu0 %1377, %v690
  %v1379 = vpop.permute.xlu0 %1378
  %1381 = vset.pattern.permute.xlu0 3
  %1382 = vperm.xlu0 %1381, %v691
  %v1383 = vpop.permute.xlu0 %1382
  %1385 = vset.pattern.permute.xlu0 3
  %1386 = vperm.xlu0 %1385, %v692
  %v1387 = vpop.permute.xlu0 %1386
  %1389 = vset.pattern.permute.xlu0 3
  %1390 = vperm.xlu0 %1389, %v693
  %v1391 = vpop.permute.xlu0 %1390
  %1393 = vset.pattern.permute.xlu0 3
  %1394 = vperm.xlu0 %1393, %v694
  %v1395 = vpop.permute.xlu0 %1394
  %1397 = vset.pattern.permute.xlu0 3
  %1398 = vperm.xlu0 %1397, %v695
  %v1399 = vpop.permute.xlu0 %1398
  %1401 = vset.pattern.permute.xlu0 3
  %1402 = vperm.xlu0 %1401, %v696
  %v1403 = vpop.permute.xlu0 %1402
  %1405 = vset.pattern.permute.xlu0 3
  %1406 = vperm.xlu0 %1405, %v697
  %v1407 = vpop.permute.xlu0 %1406
  %1409 = vset.pattern.permute.xlu0 3
  %1410 = vperm.xlu0 %1409, %v698
  %v1411 = vpop.permute.xlu0 %1410
  %1413 = vset.pattern.permute.xlu0 3
  %1414 = vperm.xlu0 %1413, %v699
  %v1415 = vpop.permute.xlu0 %1414
  %1417 = vset.pattern.permute.xlu0 3
  %1418 = vperm.xlu0 %1417, %v700
  %v1419 = vpop.permute.xlu0 %1418
  %1421 = vset.pattern.permute.xlu0 3
  %1422 = vperm.xlu0 %1421, %v701
  %v1423 = vpop.permute.xlu0 %1422
  %1425 = vset.pattern.permute.xlu0 3
  %1426 = vperm.xlu0 %1425, %v702
  %v1427 = vpop.permute.xlu0 %1426
  %1429 = vset.pattern.permute.xlu0 3
  %1430 = vperm.xlu0 %1429, %v703
  %v1431 = vpop.permute.xlu0 %1430
  %1433 = vset.pattern.permute.xlu0 3
  %1434 = vperm.xlu0 %1433, %v704
  %v1435 = vpop.permute.xlu0 %1434
  %1437 = vset.pattern.permute.xlu0 3
  %1438 = vperm.xlu0 %1437, %v705
  %v1439 = vpop.permute.xlu0 %1438
  %1441 = vset.pattern.permute.xlu0 3
  %1442 = vperm.xlu0 %1441, %v706
  %v1443 = vpop.permute.xlu0 %1442
  %1445 = vset.pattern.permute.xlu0 3
  %1446 = vperm.xlu0 %1445, %v707
  %v1447 = vpop.permute.xlu0 %1446
  %1449 = vset.pattern.permute.xlu0 3
  %1450 = vperm.xlu0 %1449, %v708
  %v1451 = vpop.permute.xlu0 %1450
  %1453 = vset.pattern.permute.xlu0 3
  %1454 = vperm.xlu0 %1453, %v709
  %v1455 = vpop.permute.xlu0 %1454
  %1457 = vset.pattern.permute.xlu0 3
  %1458 = vperm.xlu0 %1457, %v710
  %v1459 = vpop.permute.xlu0 %1458
  %1461 = vset.pattern.permute.xlu0 3
  %1462 = vperm.xlu0 %1461, %v711
  %v1463 = vpop.permute.xlu0 %1462
  %1465 = vset.pattern.permute.xlu0 3
  %1466 = vperm.xlu0 %1465, %v712
  %v1467 = vpop.permute.xlu0 %1466
  %v1469 = vlaneseq
  %v1470 = vshrl.u32 %v1469, 7
  %v1471 = vsub.s32 3, %v1470
  %v1472 = vrot.slane %v713, %v1471
  %v1473 = vmul.f32 %v1343, %v1472
  %v1474 = vmul.f32 %v1347, %v1472
  %v1475 = vmul.f32 %v1351, %v1472
  %v1476 = vmul.f32 %v1355, %v1472
  %v1477 = vmul.f32 %v1359, %v1472
  %v1478 = vmul.f32 %v1363, %v1472
  %v1479 = vmul.f32 %v1367, %v1472
  %v1480 = vmul.f32 %v1371, %v1472
  %v1481 = vmul.f32 %v1375, %v1472
  %v1482 = vmul.f32 %v1379, %v1472
  %v1483 = vmul.f32 %v1383, %v1472
  %v1484 = vmul.f32 %v1387, %v1472
  %v1485 = vmul.f32 %v1391, %v1472
  %v1486 = vmul.f32 %v1395, %v1472
  %v1487 = vmul.f32 %v1399, %v1472
  %v1488 = vmul.f32 %v1403, %v1472
  %v1489 = vmul.f32 %v1407, %v1472
  %v1490 = vmul.f32 %v1411, %v1472
  %v1491 = vmul.f32 %v1415, %v1472
  %v1492 = vmul.f32 %v1419, %v1472
  %v1493 = vmul.f32 %v1423, %v1472
  %v1494 = vmul.f32 %v1427, %v1472
  %v1495 = vmul.f32 %v1431, %v1472
  %v1496 = vmul.f32 %v1435, %v1472
  %v1497 = vmul.f32 %v1439, %v1472
  %v1498 = vmul.f32 %v1443, %v1472
  %v1499 = vmul.f32 %v1447, %v1472
  %v1500 = vmul.f32 %v1451, %v1472
  %v1501 = vmul.f32 %v1455, %v1472
  %v1502 = vmul.f32 %v1459, %v1472
  %v1503 = vmul.f32 %v1463, %v1472
  %v1504 = vmul.f32 %v1467, %v1472
  %v1505 = vadd.f32 %v1309, %v1473
  %v1506 = vadd.f32 %v1310, %v1474
  %v1507 = vadd.f32 %v1311, %v1475
  %v1508 = vadd.f32 %v1312, %v1476
  %v1509 = vadd.f32 %v1313, %v1477
  %v1510 = vadd.f32 %v1314, %v1478
  %v1511 = vadd.f32 %v1315, %v1479
  %v1512 = vadd.f32 %v1316, %v1480
  %v1513 = vadd.f32 %v1317, %v1481
  %v1514 = vadd.f32 %v1318, %v1482
  %v1515 = vadd.f32 %v1319, %v1483
  %v1516 = vadd.f32 %v1320, %v1484
  %v1517 = vadd.f32 %v1321, %v1485
  %v1518 = vadd.f32 %v1322, %v1486
  %v1519 = vadd.f32 %v1323, %v1487
  %v1520 = vadd.f32 %v1324, %v1488
  %v1521 = vadd.f32 %v1325, %v1489
  %v1522 = vadd.f32 %v1326, %v1490
  %v1523 = vadd.f32 %v1327, %v1491
  %v1524 = vadd.f32 %v1328, %v1492
  %v1525 = vadd.f32 %v1329, %v1493
  %v1526 = vadd.f32 %v1330, %v1494
  %v1527 = vadd.f32 %v1331, %v1495
  %v1528 = vadd.f32 %v1332, %v1496
  %v1529 = vadd.f32 %v1333, %v1497
  %v1530 = vadd.f32 %v1334, %v1498
  %v1531 = vadd.f32 %v1335, %v1499
  %v1532 = vadd.f32 %v1336, %v1500
  %v1533 = vadd.f32 %v1337, %v1501
  %v1534 = vadd.f32 %v1338, %v1502
  %v1535 = vadd.f32 %v1339, %v1503
  %v1536 = vadd.f32 %v1340, %v1504
  %v1545 = vunpack.c.l.b16 %v673
  %v1546 = vunpack.c.l.b16 %v674
  %v1547 = vunpack.c.l.b16 %v675
  %v1548 = vunpack.c.l.b16 %v676
  %v1549 = vunpack.c.l.b16 %v677
  %v1550 = vunpack.c.l.b16 %v678
  %v1551 = vunpack.c.l.b16 %v679
  %v1552 = vunpack.c.l.b16 %v680
  %v1553 = vpack.c.b16 %v1546, %v1545
  %v1554 = vpack.c.b16 %v1548, %v1547
  %v1555 = vpack.c.b16 %v1550, %v1549
  %v1556 = vpack.c.b16 %v1552, %v1551
  %v1562 = vsel %vm415, %v657, 0
  %v1565 = vsel %vm415, %v658, 0
  %v1568 = vsel %vm415, %v659, 0
  %v1571 = vsel %vm415, %v660, 0
  %v1574 = vsel %vm415, %v661, 0
  %v1577 = vsel %vm415, %v662, 0
  %v1580 = vsel %vm415, %v663, 0
  %v1583 = vsel %vm415, %v664, 0
  %v1586 = vsel %vm415, %v665, 0
  %v1589 = vsel %vm415, %v666, 0
  %v1592 = vsel %vm415, %v667, 0
  %v1595 = vsel %vm415, %v668, 0
  %v1598 = vsel %vm415, %v669, 0
  %v1601 = vsel %vm415, %v670, 0
  %v1604 = vsel %vm415, %v671, 0
  %v1607 = vsel %vm415, %v672, 0
  %1609 = vmatprep.subr.bf16.mxu0 0
  %1610 = vmatpush1.bf16.msra.mxu0 %v1553
  %1611 = vmatprep.subr.bf16.mxu0 0
  %1612 = vmatpush1.bf16.msra.mxu0 %v1554
  %1613 = vmatprep.subr.bf16.mxu0 0
  %1614 = vmatpush1.bf16.msra.mxu0 %v1555
  %1615 = vmatprep.subr.bf16.mxu0 0
  %1616 = vmatpush1.bf16.msra.mxu0 %v1556
  %1617 = vmatprep.subr.bf16.mxu0 0
  %1618 = vmatpush1.bf16.msra.mxu0 0
  %1619 = vmatprep.subr.bf16.mxu0 0
  %1620 = vmatpush1.bf16.msra.mxu0 0
  %1621 = vmatprep.subr.bf16.mxu0 0
  %1622 = vmatpush1.bf16.msra.mxu0 0
  %1623 = vmatprep.subr.bf16.mxu0 0
  %1624 = vmatpush1.bf16.msra.mxu0 0
  %1625 = vmatprep.subr.bf16.mxu0 0
  %1626 = vmatpush1.bf16.msra.mxu0 0
  %1627 = vmatprep.subr.bf16.mxu0 0
  %1628 = vmatpush1.bf16.msra.mxu0 0
  %1629 = vmatprep.subr.bf16.mxu0 0
  %1630 = vmatpush1.bf16.msra.mxu0 0
  %1631 = vmatprep.subr.bf16.mxu0 0
  %1632 = vmatpush1.bf16.msra.mxu0 0
  %1633 = vmatprep.subr.bf16.mxu0 0
  %1634 = vmatpush1.bf16.msra.mxu0 0
  %1635 = vmatprep.subr.bf16.mxu0 0
  %1636 = vmatpush1.bf16.msra.mxu0 0
  %1637 = vmatprep.subr.bf16.mxu0 0
  %1638 = vmatpush1.bf16.msra.mxu0 0
  %1639 = vmatprep.subr.bf16.mxu0 0
  %1640 = vmatpush1.bf16.msra.mxu0 0
  %1641 = vmatprep.mubr.bf16.mxu0 0
  %1642 = vmatmul.mubr.bf16.gmra.mrb[0].mxu0 %v1562
  %v1643 = vpop.f32.mrb[0].mxu0
  %v1644 = vadd.f32 %v1505, %v1643
  %v1645 = vpop.f32.mrb[0].mxu0
  %v1646 = vpop.f32.mrb[0].mxu0
  %v1647 = vadd.f32 %v1506, %v1646
  %v1648 = vpop.f32.mrb[0].mxu0
  %1649 = vmatprep.mubr.bf16.mxu0 0
  %1650 = vmatmul.mubr.bf16.gmra.mrb[0].mxu0 %v1565
  %v1651 = vpop.f32.mrb[0].mxu0
  %v1652 = vadd.f32 %v1507, %v1651
  %v1653 = vpop.f32.mrb[0].mxu0
  %v1654 = vpop.f32.mrb[0].mxu0
  %v1655 = vadd.f32 %v1508, %v1654
  %v1656 = vpop.f32.mrb[0].mxu0
  %1657 = vmatprep.mubr.bf16.mxu0 0
  %1658 = vmatmul.mubr.bf16.gmra.mrb[0].mxu0 %v1568
  %v1659 = vpop.f32.mrb[0].mxu0
  %v1660 = vadd.f32 %v1509, %v1659
  %v1661 = vpop.f32.mrb[0].mxu0
  %v1662 = vpop.f32.mrb[0].mxu0
  %v1663 = vadd.f32 %v1510, %v1662
  %v1664 = vpop.f32.mrb[0].mxu0
  %1665 = vmatprep.mubr.bf16.mxu0 0
  %1666 = vmatmul.mubr.bf16.gmra.mrb[0].mxu0 %v1571
  %v1667 = vpop.f32.mrb[0].mxu0
  %v1668 = vadd.f32 %v1511, %v1667
  %v1669 = vpop.f32.mrb[0].mxu0
  %v1670 = vpop.f32.mrb[0].mxu0
  %v1671 = vadd.f32 %v1512, %v1670
  %v1672 = vpop.f32.mrb[0].mxu0
  %1673 = vmatprep.mubr.bf16.mxu0 0
  %1674 = vmatmul.mubr.bf16.gmra.mrb[0].mxu0 %v1574
  %v1675 = vpop.f32.mrb[0].mxu0
  %v1676 = vadd.f32 %v1513, %v1675
  %v1677 = vpop.f32.mrb[0].mxu0
  %v1678 = vpop.f32.mrb[0].mxu0
  %v1679 = vadd.f32 %v1514, %v1678
  %v1680 = vpop.f32.mrb[0].mxu0
  %1681 = vmatprep.mubr.bf16.mxu0 0
  %1682 = vmatmul.mubr.bf16.gmra.mrb[0].mxu0 %v1577
  %v1683 = vpop.f32.mrb[0].mxu0
  %v1684 = vadd.f32 %v1515, %v1683
  %v1685 = vpop.f32.mrb[0].mxu0
  %v1686 = vpop.f32.mrb[0].mxu0
  %v1687 = vadd.f32 %v1516, %v1686
  %v1688 = vpop.f32.mrb[0].mxu0
  %1689 = vmatprep.mubr.bf16.mxu0 0
  %1690 = vmatmul.mubr.bf16.gmra.mrb[0].mxu0 %v1580
  %v1691 = vpop.f32.mrb[0].mxu0
  %v1692 = vadd.f32 %v1517, %v1691
  %v1693 = vpop.f32.mrb[0].mxu0
  %v1694 = vpop.f32.mrb[0].mxu0
  %v1695 = vadd.f32 %v1518, %v1694
  %v1696 = vpop.f32.mrb[0].mxu0
  %1697 = vmatprep.mubr.bf16.mxu0 0
  %1698 = vmatmul.mubr.bf16.gmra.mrb[0].mxu0 %v1583
  %v1699 = vpop.f32.mrb[0].mxu0
  %v1700 = vadd.f32 %v1519, %v1699
  %v1701 = vpop.f32.mrb[0].mxu0
  %v1702 = vpop.f32.mrb[0].mxu0
  %v1703 = vadd.f32 %v1520, %v1702
  %v1704 = vpop.f32.mrb[0].mxu0
  %1705 = vmatprep.mubr.bf16.mxu0 0
  %1706 = vmatmul.mubr.bf16.gmra.mrb[0].mxu0 %v1586
  %v1707 = vpop.f32.mrb[0].mxu0
  %v1708 = vadd.f32 %v1521, %v1707
  %v1709 = vpop.f32.mrb[0].mxu0
  %v1710 = vpop.f32.mrb[0].mxu0
  %v1711 = vadd.f32 %v1522, %v1710
  %v1712 = vpop.f32.mrb[0].mxu0
  %1713 = vmatprep.mubr.bf16.mxu0 0
  %1714 = vmatmul.mubr.bf16.gmra.mrb[0].mxu0 %v1589
  %v1715 = vpop.f32.mrb[0].mxu0
  %v1716 = vadd.f32 %v1523, %v1715
  %v1717 = vpop.f32.mrb[0].mxu0
  %v1718 = vpop.f32.mrb[0].mxu0
  %v1719 = vadd.f32 %v1524, %v1718
  %v1720 = vpop.f32.mrb[0].mxu0
  %1721 = vmatprep.mubr.bf16.mxu0 0
  %1722 = vmatmul.mubr.bf16.gmra.mrb[0].mxu0 %v1592
  %v1723 = vpop.f32.mrb[0].mxu0
  %v1724 = vadd.f32 %v1525, %v1723
  %v1725 = vpop.f32.mrb[0].mxu0
  %v1726 = vpop.f32.mrb[0].mxu0
  %v1727 = vadd.f32 %v1526, %v1726
  %v1728 = vpop.f32.mrb[0].mxu0
  %1729 = vmatprep.mubr.bf16.mxu0 0
  %1730 = vmatmul.mubr.bf16.gmra.mrb[0].mxu0 %v1595
  %v1731 = vpop.f32.mrb[0].mxu0
  %v1732 = vadd.f32 %v1527, %v1731
  %v1733 = vpop.f32.mrb[0].mxu0
  %v1734 = vpop.f32.mrb[0].mxu0
  %v1735 = vadd.f32 %v1528, %v1734
  %v1736 = vpop.f32.mrb[0].mxu0
  %1737 = vmatprep.mubr.bf16.mxu0 0
  %1738 = vmatmul.mubr.bf16.gmra.mrb[0].mxu0 %v1598
  %v1739 = vpop.f32.mrb[0].mxu0
  %v1740 = vadd.f32 %v1529, %v1739
  %v1741 = vpop.f32.mrb[0].mxu0
  %v1742 = vpop.f32.mrb[0].mxu0
  %v1743 = vadd.f32 %v1530, %v1742
  %v1744 = vpop.f32.mrb[0].mxu0
  %1745 = vmatprep.mubr.bf16.mxu0 0
  %1746 = vmatmul.mubr.bf16.gmra.mrb[0].mxu0 %v1601
  %v1747 = vpop.f32.mrb[0].mxu0
  %v1748 = vadd.f32 %v1531, %v1747
  %v1749 = vpop.f32.mrb[0].mxu0
  %v1750 = vpop.f32.mrb[0].mxu0
  %v1751 = vadd.f32 %v1532, %v1750
  %v1752 = vpop.f32.mrb[0].mxu0
  %1753 = vmatprep.mubr.bf16.mxu0 0
  %1754 = vmatmul.mubr.bf16.gmra.mrb[0].mxu0 %v1604
  %v1755 = vpop.f32.mrb[0].mxu0
  %v1756 = vadd.f32 %v1533, %v1755
  %v1757 = vpop.f32.mrb[0].mxu0
  %v1758 = vpop.f32.mrb[0].mxu0
  %v1759 = vadd.f32 %v1534, %v1758
  %v1760 = vpop.f32.mrb[0].mxu0
  %1761 = vmatprep.mubr.bf16.mxu0 0
  %1762 = vmatmul.mubr.bf16.gmra.mrb[0].mxu0 %v1607
  %v1763 = vpop.f32.mrb[0].mxu0
  %v1764 = vadd.f32 %v1535, %v1763
  %v1765 = vpop.f32.mrb[0].mxu0
  %v1766 = vpop.f32.mrb[0].mxu0
  %v1767 = vadd.f32 %v1536, %v1766
  %v1768 = vpop.f32.mrb[0].mxu0
  %1769 = vdwg.mxu0
  %v1770 = vld [vmem:[%s2] sm:$0xff]
  %v1771 = vld [vmem:[%s2 + $0x8] sm:$0xff]
  %v1772 = vld [vmem:[%s2 + $0x10] sm:$0xff]
  %v1773 = vld [vmem:[%s2 + $0x18] sm:$0xff]
  %v1774 = vld [vmem:[%s2 + $0x20] sm:$0xff]
  %v1775 = vld [vmem:[%s2 + $0x28] sm:$0xff]
  %v1776 = vld [vmem:[%s2 + $0x30] sm:$0xff]
  %v1777 = vld [vmem:[%s2 + $0x38] sm:$0xff]
  %v1778 = vld [vmem:[%s2 + $0x40] sm:$0xff]
  %v1779 = vld [vmem:[%s2 + $0x48] sm:$0xff]
  %v1780 = vld [vmem:[%s2 + $0x50] sm:$0xff]
  %v1781 = vld [vmem:[%s2 + $0x58] sm:$0xff]
  %v1782 = vld [vmem:[%s2 + $0x60] sm:$0xff]
  %v1783 = vld [vmem:[%s2 + $0x68] sm:$0xff]
  %v1784 = vld [vmem:[%s2 + $0x70] sm:$0xff]
  %v1785 = vld [vmem:[%s2 + $0x78] sm:$0xff]
  %v1786 = vld [vmem:[%s2 + $0x80] sm:$0xff]
  %v1787 = vld [vmem:[%s2 + $0x88] sm:$0xff]
  %v1788 = vld [vmem:[%s2 + $0x90] sm:$0xff]
  %v1789 = vld [vmem:[%s2 + $0x98] sm:$0xff]
  %v1790 = vld [vmem:[%s2 + $0xa0] sm:$0xff]
  %v1791 = vld [vmem:[%s2 + $0xa8] sm:$0xff]
  %v1792 = vld [vmem:[%s2 + $0xb0] sm:$0xff]
  %v1793 = vld [vmem:[%s2 + $0xb8] sm:$0xff]
  %v1794 = vld [vmem:[%s2 + $0xc0] sm:$0xff]
  %v1795 = vld [vmem:[%s2 + $0xc8] sm:$0xff]
  %v1796 = vld [vmem:[%s2 + $0xd0] sm:$0xff]
  %v1797 = vld [vmem:[%s2 + $0xd8] sm:$0xff]
  %v1798 = vld [vmem:[%s2 + $0xe0] sm:$0xff]
  %v1799 = vld [vmem:[%s2 + $0xe8] sm:$0xff]
  %v1800 = vld [vmem:[%s2 + $0xf0] sm:$0xff]
  %v1801 = vld [vmem:[%s2 + $0xf8] sm:$0xff]
  %v1802 = vlog2.pop %v1770
  %v1803 = vmul.f32 %v1802, 0.6931472
  %v1804 = vlog2.pop %v1771
  %v1805 = vmul.f32 %v1804, 0.6931472
  %v1806 = vlog2.pop %v1772
  %v1807 = vmul.f32 %v1806, 0.6931472
  %v1808 = vlog2.pop %v1773
  %v1809 = vmul.f32 %v1808, 0.6931472
  %v1810 = vlog2.pop %v1774
  %v1811 = vmul.f32 %v1810, 0.6931472
  %v1812 = vlog2.pop %v1775
  %v1813 = vmul.f32 %v1812, 0.6931472
  %v1814 = vlog2.pop %v1776
  %v1815 = vmul.f32 %v1814, 0.6931472
  %v1816 = vlog2.pop %v1777
  %v1817 = vmul.f32 %v1816, 0.6931472
  %v1818 = vlog2.pop %v1778
  %v1819 = vmul.f32 %v1818, 0.6931472
  %v1820 = vlog2.pop %v1779
  %v1821 = vmul.f32 %v1820, 0.6931472
  %v1822 = vlog2.pop %v1780
  %v1823 = vmul.f32 %v1822, 0.6931472
  %v1824 = vlog2.pop %v1781
  %v1825 = vmul.f32 %v1824, 0.6931472
  %v1826 = vlog2.pop %v1782
  %v1827 = vmul.f32 %v1826, 0.6931472
  %v1828 = vlog2.pop %v1783
  %v1829 = vmul.f32 %v1828, 0.6931472
  %v1830 = vlog2.pop %v1784
  %v1831 = vmul.f32 %v1830, 0.6931472
  %v1832 = vlog2.pop %v1785
  %v1833 = vmul.f32 %v1832, 0.6931472
  %v1834 = vlog2.pop %v1786
  %v1835 = vmul.f32 %v1834, 0.6931472
  %v1836 = vlog2.pop %v1787
  %v1837 = vmul.f32 %v1836, 0.6931472
  %v1838 = vlog2.pop %v1788
  %v1839 = vmul.f32 %v1838, 0.6931472
  %v1840 = vlog2.pop %v1789
  %v1841 = vmul.f32 %v1840, 0.6931472
  %v1842 = vlog2.pop %v1790
  %v1843 = vmul.f32 %v1842, 0.6931472
  %v1844 = vlog2.pop %v1791
  %v1845 = vmul.f32 %v1844, 0.6931472
  %v1846 = vlog2.pop %v1792
  %v1847 = vmul.f32 %v1846, 0.6931472
  %v1848 = vlog2.pop %v1793
  %v1849 = vmul.f32 %v1848, 0.6931472
  %v1850 = vlog2.pop %v1794
  %v1851 = vmul.f32 %v1850, 0.6931472
  %v1852 = vlog2.pop %v1795
  %v1853 = vmul.f32 %v1852, 0.6931472
  %v1854 = vlog2.pop %v1796
  %v1855 = vmul.f32 %v1854, 0.6931472
  %v1856 = vlog2.pop %v1797
  %v1857 = vmul.f32 %v1856, 0.6931472
  %v1858 = vlog2.pop %v1798
  %v1859 = vmul.f32 %v1858, 0.6931472
  %v1860 = vlog2.pop %v1799
  %v1861 = vmul.f32 %v1860, 0.6931472
  %v1862 = vlog2.pop %v1800
  %v1863 = vmul.f32 %v1862, 0.6931472
  %v1864 = vlog2.pop %v1801
  %v1865 = vmul.f32 %v1864, 0.6931472
  %v1866 = vmax.f32 %v1803, -3.4028235e+38
  %v1867 = vmax.f32 %v1805, -3.4028235e+38
  %v1868 = vmax.f32 %v1807, -3.4028235e+38
  %v1869 = vmax.f32 %v1809, -3.4028235e+38
  %v1870 = vmax.f32 %v1811, -3.4028235e+38
  %v1871 = vmax.f32 %v1813, -3.4028235e+38
  %v1872 = vmax.f32 %v1815, -3.4028235e+38
  %v1873 = vmax.f32 %v1817, -3.4028235e+38
  %v1874 = vmax.f32 %v1819, -3.4028235e+38
  %v1875 = vmax.f32 %v1821, -3.4028235e+38
  %v1876 = vmax.f32 %v1823, -3.4028235e+38
  %v1877 = vmax.f32 %v1825, -3.4028235e+38
  %v1878 = vmax.f32 %v1827, -3.4028235e+38
  %v1879 = vmax.f32 %v1829, -3.4028235e+38
  %v1880 = vmax.f32 %v1831, -3.4028235e+38
  %v1881 = vmax.f32 %v1833, -3.4028235e+38
  %v1882 = vmax.f32 %v1835, -3.4028235e+38
  %v1883 = vmax.f32 %v1837, -3.4028235e+38
  %v1884 = vmax.f32 %v1839, -3.4028235e+38
  %v1885 = vmax.f32 %v1841, -3.4028235e+38
  %v1886 = vmax.f32 %v1843, -3.4028235e+38
  %v1887 = vmax.f32 %v1845, -3.4028235e+38
  %v1888 = vmax.f32 %v1847, -3.4028235e+38
  %v1889 = vmax.f32 %v1849, -3.4028235e+38
  %v1890 = vmax.f32 %v1851, -3.4028235e+38
  %v1891 = vmax.f32 %v1853, -3.4028235e+38
  %v1892 = vmax.f32 %v1855, -3.4028235e+38
  %v1893 = vmax.f32 %v1857, -3.4028235e+38
  %v1894 = vmax.f32 %v1859, -3.4028235e+38
  %v1895 = vmax.f32 %v1861, -3.4028235e+38
  %v1896 = vmax.f32 %v1863, -3.4028235e+38
  %v1897 = vmax.f32 %v1865, -3.4028235e+38
  %v1898 = vadd.f32 %v1644, %v1866
  %v1899 = vadd.f32 %v1647, %v1867
  %v1900 = vadd.f32 %v1652, %v1868
  %v1901 = vadd.f32 %v1655, %v1869
  %v1902 = vadd.f32 %v1660, %v1870
  %v1903 = vadd.f32 %v1663, %v1871
  %v1904 = vadd.f32 %v1668, %v1872
  %v1905 = vadd.f32 %v1671, %v1873
  %v1906 = vadd.f32 %v1676, %v1874
  %v1907 = vadd.f32 %v1679, %v1875
  %v1908 = vadd.f32 %v1684, %v1876
  %v1909 = vadd.f32 %v1687, %v1877
  %v1910 = vadd.f32 %v1692, %v1878
  %v1911 = vadd.f32 %v1695, %v1879
  %v1912 = vadd.f32 %v1700, %v1880
  %v1913 = vadd.f32 %v1703, %v1881
  %v1914 = vadd.f32 %v1708, %v1882
  %v1915 = vadd.f32 %v1711, %v1883
  %v1916 = vadd.f32 %v1716, %v1884
  %v1917 = vadd.f32 %v1719, %v1885
  %v1918 = vadd.f32 %v1724, %v1886
  %v1919 = vadd.f32 %v1727, %v1887
  %v1920 = vadd.f32 %v1732, %v1888
  %v1921 = vadd.f32 %v1735, %v1889
  %v1922 = vadd.f32 %v1740, %v1890
  %v1923 = vadd.f32 %v1743, %v1891
  %v1924 = vadd.f32 %v1748, %v1892
  %v1925 = vadd.f32 %v1751, %v1893
  %v1926 = vadd.f32 %v1756, %v1894
  %v1927 = vadd.f32 %v1759, %v1895
  %v1928 = vadd.f32 %v1764, %v1896
  %v1929 = vadd.f32 %v1767, %v1897
  %vm1930 = vcmask 130048
  %1931 = vst.msk [vmem:[%s12] sm:$0xff] %vm1930, %v1898
  %1932 = vst.msk [vmem:[%s12 + $0x8] sm:$0xff] %vm1930, %v1899
  %1933 = vst.msk [vmem:[%s12 + $0x10] sm:$0xff] %vm1930, %v1900
  %1934 = vst.msk [vmem:[%s12 + $0x18] sm:$0xff] %vm1930, %v1901
  %1935 = vst.msk [vmem:[%s12 + $0x20] sm:$0xff] %vm1930, %v1902
  %1936 = vst.msk [vmem:[%s12 + $0x28] sm:$0xff] %vm1930, %v1903
  %1937 = vst.msk [vmem:[%s12 + $0x30] sm:$0xff] %vm1930, %v1904
  %1938 = vst.msk [vmem:[%s12 + $0x38] sm:$0xff] %vm1930, %v1905
  %1939 = vst.msk [vmem:[%s12 + $0x40] sm:$0xff] %vm1930, %v1906
  %1940 = vst.msk [vmem:[%s12 + $0x48] sm:$0xff] %vm1930, %v1907
  %1941 = vst.msk [vmem:[%s12 + $0x50] sm:$0xff] %vm1930, %v1908
  %1942 = vst.msk [vmem:[%s12 + $0x58] sm:$0xff] %vm1930, %v1909
  %1943 = vst.msk [vmem:[%s12 + $0x60] sm:$0xff] %vm1930, %v1910
  %1944 = vst.msk [vmem:[%s12 + $0x68] sm:$0xff] %vm1930, %v1911
  %1945 = vst.msk [vmem:[%s12 + $0x70] sm:$0xff] %vm1930, %v1912
  %1946 = vst.msk [vmem:[%s12 + $0x78] sm:$0xff] %vm1930, %v1913
  %1947 = vst.msk [vmem:[%s12 + $0x80] sm:$0xff] %vm1930, %v1914
  %1948 = vst.msk [vmem:[%s12 + $0x88] sm:$0xff] %vm1930, %v1915
  %1949 = vst.msk [vmem:[%s12 + $0x90] sm:$0xff] %vm1930, %v1916
  %1950 = vst.msk [vmem:[%s12 + $0x98] sm:$0xff] %vm1930, %v1917
  %1951 = vst.msk [vmem:[%s12 + $0xa0] sm:$0xff] %vm1930, %v1918
  %1952 = vst.msk [vmem:[%s12 + $0xa8] sm:$0xff] %vm1930, %v1919
  %1953 = vst.msk [vmem:[%s12 + $0xb0] sm:$0xff] %vm1930, %v1920
  %1954 = vst.msk [vmem:[%s12 + $0xb8] sm:$0xff] %vm1930, %v1921
  %1955 = vst.msk [vmem:[%s12 + $0xc0] sm:$0xff] %vm1930, %v1922
  %1956 = vst.msk [vmem:[%s12 + $0xc8] sm:$0xff] %vm1930, %v1923
  %1957 = vst.msk [vmem:[%s12 + $0xd0] sm:$0xff] %vm1930, %v1924
  %1958 = vst.msk [vmem:[%s12 + $0xd8] sm:$0xff] %vm1930, %v1925
  %1959 = vst.msk [vmem:[%s12 + $0xe0] sm:$0xff] %vm1930, %v1926
  %1960 = vst.msk [vmem:[%s12 + $0xe8] sm:$0xff] %vm1930, %v1927
  %1961 = vst.msk [vmem:[%s12 + $0xf0] sm:$0xff] %vm1930, %v1928
  %1962 = vst.msk [vmem:[%s12 + $0xf8] sm:$0xff] %vm1930, %v1929
  %1963 = vst.msk [vmem:[%s13] sm:$0xff] %vm1930, %v1644
  %1964 = vst.msk [vmem:[%s13 + $0x8] sm:$0xff] %vm1930, %v1647
  %1965 = vst.msk [vmem:[%s13 + $0x10] sm:$0xff] %vm1930, %v1652
  %1966 = vst.msk [vmem:[%s13 + $0x18] sm:$0xff] %vm1930, %v1655
  %1967 = vst.msk [vmem:[%s13 + $0x20] sm:$0xff] %vm1930, %v1660
  %1968 = vst.msk [vmem:[%s13 + $0x28] sm:$0xff] %vm1930, %v1663
  %1969 = vst.msk [vmem:[%s13 + $0x30] sm:$0xff] %vm1930, %v1668
  %1970 = vst.msk [vmem:[%s13 + $0x38] sm:$0xff] %vm1930, %v1671
  %1971 = vst.msk [vmem:[%s13 + $0x40] sm:$0xff] %vm1930, %v1676
  %1972 = vst.msk [vmem:[%s13 + $0x48] sm:$0xff] %vm1930, %v1679
  %1973 = vst.msk [vmem:[%s13 + $0x50] sm:$0xff] %vm1930, %v1684
  %1974 = vst.msk [vmem:[%s13 + $0x58] sm:$0xff] %vm1930, %v1687
  %1975 = vst.msk [vmem:[%s13 + $0x60] sm:$0xff] %vm1930, %v1692
  %1976 = vst.msk [vmem:[%s13 + $0x68] sm:$0xff] %vm1930, %v1695
  %1977 = vst.msk [vmem:[%s13 + $0x70] sm:$0xff] %vm1930, %v1700
  %1978 = vst.msk [vmem:[%s13 + $0x78] sm:$0xff] %vm1930, %v1703
  %1979 = vst.msk [vmem:[%s13 + $0x80] sm:$0xff] %vm1930, %v1708
  %1980 = vst.msk [vmem:[%s13 + $0x88] sm:$0xff] %vm1930, %v1711
  %1981 = vst.msk [vmem:[%s13 + $0x90] sm:$0xff] %vm1930, %v1716
  %1982 = vst.msk [vmem:[%s13 + $0x98] sm:$0xff] %vm1930, %v1719
  %1983 = vst.msk [vmem:[%s13 + $0xa0] sm:$0xff] %vm1930, %v1724
  %1984 = vst.msk [vmem:[%s13 + $0xa8] sm:$0xff] %vm1930, %v1727
  %1985 = vst.msk [vmem:[%s13 + $0xb0] sm:$0xff] %vm1930, %v1732
  %1986 = vst.msk [vmem:[%s13 + $0xb8] sm:$0xff] %vm1930, %v1735
  %1987 = vst.msk [vmem:[%s13 + $0xc0] sm:$0xff] %vm1930, %v1740
  %1988 = vst.msk [vmem:[%s13 + $0xc8] sm:$0xff] %vm1930, %v1743
  %1989 = vst.msk [vmem:[%s13 + $0xd0] sm:$0xff] %vm1930, %v1748
  %1990 = vst.msk [vmem:[%s13 + $0xd8] sm:$0xff] %vm1930, %v1751
  %1991 = vst.msk [vmem:[%s13 + $0xe0] sm:$0xff] %vm1930, %v1756
  %1992 = vst.msk [vmem:[%s13 + $0xe8] sm:$0xff] %vm1930, %v1759
  %1993 = vst.msk [vmem:[%s13 + $0xf0] sm:$0xff] %vm1930, %v1764
  %1994 = vst.msk [vmem:[%s13 + $0xf8] sm:$0xff] %vm1930, %v1767
  %v1995 = vld [vmem:[%s10] sm:$0x1]
  %v1997 = vlaneseq
  %v1998 = vshrl.u32 %v1997, 7
  %v1999 = vsub.s32 0, %v1998
  %v2000 = vrot.slane %v1995, %v1999
  %v2002 = vmul.f32 %v1644, %v2000
  %v2003 = vmul.f32 %v1647, %v2000
  %v2004 = vmul.f32 %v1652, %v2000
  %v2005 = vmul.f32 %v1655, %v2000
  %v2006 = vmul.f32 %v1660, %v2000
  %v2007 = vmul.f32 %v1663, %v2000
  %v2008 = vmul.f32 %v1668, %v2000
  %v2009 = vmul.f32 %v1671, %v2000
  %v2010 = vmul.f32 %v1676, %v2000
  %v2011 = vmul.f32 %v1679, %v2000
  %v2012 = vmul.f32 %v1684, %v2000
  %v2013 = vmul.f32 %v1687, %v2000
  %v2014 = vmul.f32 %v1692, %v2000
  %v2015 = vmul.f32 %v1695, %v2000
  %v2016 = vmul.f32 %v1700, %v2000
  %v2017 = vmul.f32 %v1703, %v2000
  %v2018 = vmul.f32 %v1708, %v2000
  %v2019 = vmul.f32 %v1711, %v2000
  %v2020 = vmul.f32 %v1716, %v2000
  %v2021 = vmul.f32 %v1719, %v2000
  %v2022 = vmul.f32 %v1724, %v2000
  %v2023 = vmul.f32 %v1727, %v2000
  %v2024 = vmul.f32 %v1732, %v2000
  %v2025 = vmul.f32 %v1735, %v2000
  %v2026 = vmul.f32 %v1740, %v2000
  %v2027 = vmul.f32 %v1743, %v2000
  %v2028 = vmul.f32 %v1748, %v2000
  %v2029 = vmul.f32 %v1751, %v2000
  %v2030 = vmul.f32 %v1756, %v2000
  %v2031 = vmul.f32 %v1759, %v2000
  %v2032 = vmul.f32 %v1764, %v2000
  %v2033 = vmul.f32 %v1767, %v2000
  %v2034 = vsel %vm1930, %v2002, 0.0
  %2035 = vadd.xlane.f32.xlu0 %v2034
  %v2036 = vpop.xlane.xlu0 %2035
  %v2037 = vsel %vm1930, %v2003, 0.0
  %2038 = vadd.xlane.f32.xlu0 %v2037
  %v2039 = vpop.xlane.xlu0 %2038
  %v2040 = vsel %vm1930, %v2004, 0.0
  %2041 = vadd.xlane.f32.xlu0 %v2040
  %v2042 = vpop.xlane.xlu0 %2041
  %v2043 = vsel %vm1930, %v2005, 0.0
  %2044 = vadd.xlane.f32.xlu0 %v2043
  %v2045 = vpop.xlane.xlu0 %2044
  %v2046 = vsel %vm1930, %v2006, 0.0
  %2047 = vadd.xlane.f32.xlu0 %v2046
  %v2048 = vpop.xlane.xlu0 %2047
  %v2049 = vsel %vm1930, %v2007, 0.0
  %2050 = vadd.xlane.f32.xlu0 %v2049
  %v2051 = vpop.xlane.xlu0 %2050
  %v2052 = vsel %vm1930, %v2008, 0.0
  %2053 = vadd.xlane.f32.xlu0 %v2052
  %v2054 = vpop.xlane.xlu0 %2053
  %v2055 = vsel %vm1930, %v2009, 0.0
  %2056 = vadd.xlane.f32.xlu0 %v2055
  %v2057 = vpop.xlane.xlu0 %2056
  %v2058 = vsel %vm1930, %v2010, 0.0
  %2059 = vadd.xlane.f32.xlu0 %v2058
  %v2060 = vpop.xlane.xlu0 %2059
  %v2061 = vsel %vm1930, %v2011, 0.0
  %2062 = vadd.xlane.f32.xlu0 %v2061
  %v2063 = vpop.xlane.xlu0 %2062
  %v2064 = vsel %vm1930, %v2012, 0.0
  %2065 = vadd.xlane.f32.xlu0 %v2064
  %v2066 = vpop.xlane.xlu0 %2065
  %v2067 = vsel %vm1930, %v2013, 0.0
  %2068 = vadd.xlane.f32.xlu0 %v2067
  %v2069 = vpop.xlane.xlu0 %2068
  %v2070 = vsel %vm1930, %v2014, 0.0
  %2071 = vadd.xlane.f32.xlu0 %v2070
  %v2072 = vpop.xlane.xlu0 %2071
  %v2073 = vsel %vm1930, %v2015, 0.0
  %2074 = vadd.xlane.f32.xlu0 %v2073
  %v2075 = vpop.xlane.xlu0 %2074
  %v2076 = vsel %vm1930, %v2016, 0.0
  %2077 = vadd.xlane.f32.xlu0 %v2076
  %v2078 = vpop.xlane.xlu0 %2077
  %v2079 = vsel %vm1930, %v2017, 0.0
  %2080 = vadd.xlane.f32.xlu0 %v2079
  %v2081 = vpop.xlane.xlu0 %2080
  %v2082 = vsel %vm1930, %v2018, 0.0
  %2083 = vadd.xlane.f32.xlu0 %v2082
  %v2084 = vpop.xlane.xlu0 %2083
  %v2085 = vsel %vm1930, %v2019, 0.0
  %2086 = vadd.xlane.f32.xlu0 %v2085
  %v2087 = vpop.xlane.xlu0 %2086
  %v2088 = vsel %vm1930, %v2020, 0.0
  %2089 = vadd.xlane.f32.xlu0 %v2088
  %v2090 = vpop.xlane.xlu0 %2089
  %v2091 = vsel %vm1930, %v2021, 0.0
  %2092 = vadd.xlane.f32.xlu0 %v2091
  %v2093 = vpop.xlane.xlu0 %2092
  %v2094 = vsel %vm1930, %v2022, 0.0
  %2095 = vadd.xlane.f32.xlu0 %v2094
  %v2096 = vpop.xlane.xlu0 %2095
  %v2097 = vsel %vm1930, %v2023, 0.0
  %2098 = vadd.xlane.f32.xlu0 %v2097
  %v2099 = vpop.xlane.xlu0 %2098
  %v2100 = vsel %vm1930, %v2024, 0.0
  %2101 = vadd.xlane.f32.xlu0 %v2100
  %v2102 = vpop.xlane.xlu0 %2101
  %v2103 = vsel %vm1930, %v2025, 0.0
  %2104 = vadd.xlane.f32.xlu0 %v2103
  %v2105 = vpop.xlane.xlu0 %2104
  %v2106 = vsel %vm1930, %v2026, 0.0
  %2107 = vadd.xlane.f32.xlu0 %v2106
  %v2108 = vpop.xlane.xlu0 %2107
  %v2109 = vsel %vm1930, %v2027, 0.0
  %2110 = vadd.xlane.f32.xlu0 %v2109
  %v2111 = vpop.xlane.xlu0 %2110
  %v2112 = vsel %vm1930, %v2028, 0.0
  %2113 = vadd.xlane.f32.xlu0 %v2112
  %v2114 = vpop.xlane.xlu0 %2113
  %v2115 = vsel %vm1930, %v2029, 0.0
  %2116 = vadd.xlane.f32.xlu0 %v2115
  %v2117 = vpop.xlane.xlu0 %2116
  %v2118 = vsel %vm1930, %v2030, 0.0
  %2119 = vadd.xlane.f32.xlu0 %v2118
  %v2120 = vpop.xlane.xlu0 %2119
  %v2121 = vsel %vm1930, %v2031, 0.0
  %2122 = vadd.xlane.f32.xlu0 %v2121
  %v2123 = vpop.xlane.xlu0 %2122
  %v2124 = vsel %vm1930, %v2032, 0.0
  %2125 = vadd.xlane.f32.xlu0 %v2124
  %v2126 = vpop.xlane.xlu0 %2125
  %v2127 = vsel %vm1930, %v2033, 0.0
  %2128 = vadd.xlane.f32.xlu0 %v2127
  %v2129 = vpop.xlane.xlu0 %2128
  %v2130 = vld [vmem:[#allocation2] sm:$0x1]
  %v2132 = vlaneseq
  %v2133 = vshrl.u32 %v2132, 7
  %v2134 = vsub.s32 0, %v2133
  %v2135 = vrot.slane %v2130, %v2134
  %v2137 = vadd.f32 %v2036, %v2135
  %v2138 = vadd.f32 %v2039, %v2135
  %v2139 = vadd.f32 %v2042, %v2135
  %v2140 = vadd.f32 %v2045, %v2135
  %v2141 = vadd.f32 %v2048, %v2135
  %v2142 = vadd.f32 %v2051, %v2135
  %v2143 = vadd.f32 %v2054, %v2135
  %v2144 = vadd.f32 %v2057, %v2135
  %v2145 = vadd.f32 %v2060, %v2135
  %v2146 = vadd.f32 %v2063, %v2135
  %v2147 = vadd.f32 %v2066, %v2135
  %v2148 = vadd.f32 %v2069, %v2135
  %v2149 = vadd.f32 %v2072, %v2135
  %v2150 = vadd.f32 %v2075, %v2135
  %v2151 = vadd.f32 %v2078, %v2135
  %v2152 = vadd.f32 %v2081, %v2135
  %v2153 = vadd.f32 %v2084, %v2135
  %v2154 = vadd.f32 %v2087, %v2135
  %v2155 = vadd.f32 %v2090, %v2135
  %v2156 = vadd.f32 %v2093, %v2135
  %v2157 = vadd.f32 %v2096, %v2135
  %v2158 = vadd.f32 %v2099, %v2135
  %v2159 = vadd.f32 %v2102, %v2135
  %v2160 = vadd.f32 %v2105, %v2135
  %v2161 = vadd.f32 %v2108, %v2135
  %v2162 = vadd.f32 %v2111, %v2135
  %v2163 = vadd.f32 %v2114, %v2135
  %v2164 = vadd.f32 %v2117, %v2135
  %v2165 = vadd.f32 %v2120, %v2135
  %v2166 = vadd.f32 %v2123, %v2135
  %v2167 = vadd.f32 %v2126, %v2135
  %v2168 = vadd.f32 %v2129, %v2135
  %vm2169 = vcmask 7168
  %2170 = vst.msk [vmem:[%s14] sm:$0xff] %vm2169, %v2137
  %2171 = vst.msk [vmem:[%s14 + $0x8] sm:$0xff] %vm2169, %v2138
  %2172 = vst.msk [vmem:[%s14 + $0x10] sm:$0xff] %vm2169, %v2139
  %2173 = vst.msk [vmem:[%s14 + $0x18] sm:$0xff] %vm2169, %v2140
  %2174 = vst.msk [vmem:[%s14 + $0x20] sm:$0xff] %vm2169, %v2141
  %2175 = vst.msk [vmem:[%s14 + $0x28] sm:$0xff] %vm2169, %v2142
  %2176 = vst.msk [vmem:[%s14 + $0x30] sm:$0xff] %vm2169, %v2143
  %2177 = vst.msk [vmem:[%s14 + $0x38] sm:$0xff] %vm2169, %v2144
  %2178 = vst.msk [vmem:[%s14 + $0x40] sm:$0xff] %vm2169, %v2145
  %2179 = vst.msk [vmem:[%s14 + $0x48] sm:$0xff] %vm2169, %v2146
  %2180 = vst.msk [vmem:[%s14 + $0x50] sm:$0xff] %vm2169, %v2147
  %2181 = vst.msk [vmem:[%s14 + $0x58] sm:$0xff] %vm2169, %v2148
  %2182 = vst.msk [vmem:[%s14 + $0x60] sm:$0xff] %vm2169, %v2149
  %2183 = vst.msk [vmem:[%s14 + $0x68] sm:$0xff] %vm2169, %v2150
  %2184 = vst.msk [vmem:[%s14 + $0x70] sm:$0xff] %vm2169, %v2151
  %2185 = vst.msk [vmem:[%s14 + $0x78] sm:$0xff] %vm2169, %v2152
  %2186 = vst.msk [vmem:[%s14 + $0x80] sm:$0xff] %vm2169, %v2153
  %2187 = vst.msk [vmem:[%s14 + $0x88] sm:$0xff] %vm2169, %v2154
  %2188 = vst.msk [vmem:[%s14 + $0x90] sm:$0xff] %vm2169, %v2155
  %2189 = vst.msk [vmem:[%s14 + $0x98] sm:$0xff] %vm2169, %v2156
  %2190 = vst.msk [vmem:[%s14 + $0xa0] sm:$0xff] %vm2169, %v2157
  %2191 = vst.msk [vmem:[%s14 + $0xa8] sm:$0xff] %vm2169, %v2158
  %2192 = vst.msk [vmem:[%s14 + $0xb0] sm:$0xff] %vm2169, %v2159
  %2193 = vst.msk [vmem:[%s14 + $0xb8] sm:$0xff] %vm2169, %v2160
  %2194 = vst.msk [vmem:[%s14 + $0xc0] sm:$0xff] %vm2169, %v2161
  %2195 = vst.msk [vmem:[%s14 + $0xc8] sm:$0xff] %vm2169, %v2162
  %2196 = vst.msk [vmem:[%s14 + $0xd0] sm:$0xff] %vm2169, %v2163
  %2197 = vst.msk [vmem:[%s14 + $0xd8] sm:$0xff] %vm2169, %v2164
  %2198 = vst.msk [vmem:[%s14 + $0xe0] sm:$0xff] %vm2169, %v2165
  %2199 = vst.msk [vmem:[%s14 + $0xe8] sm:$0xff] %vm2169, %v2166
  %2200 = vst.msk [vmem:[%s14 + $0xf0] sm:$0xff] %vm2169, %v2167
  %2201 = vst.msk [vmem:[%s14 + $0xf8] sm:$0xff] %vm2169, %v2168
  // Predicated region
  $region50: #{tpu_custom_call.1} parent=0 // pred_check
    _
  $region51: #{tpu_custom_call.1} parent=0 // pred_check_branch
    %2203 = sbr.rel (0) target = $region53
  $region52: #{tpu_custom_call.1} parent=0 // pred_region
    _
  $region53: #{tpu_custom_call.1} parent=0 // pred_fallthru
    _
  // Predicated region
  $region54: #{tpu_custom_call.1} parent=0 // pred_check
    _
  $region55: #{tpu_custom_call.1} parent=0 // pred_check_branch
    %2205 = sbr.rel (0) target = $region57
  $region56: #{tpu_custom_call.1} parent=0 // pred_region
    _
  $region57: #{tpu_custom_call.1} parent=0 // pred_fallthru
    _
  // Predicated region
  $region58: #{tpu_custom_call.1} parent=0 // pred_check
    _
  $region59: #{tpu_custom_call.1} parent=0 // pred_check_branch
    %2207 = sbr.rel (0) target = $region61
  $region60: #{tpu_custom_call.1} parent=0 // pred_region
    _
  $region61: #{tpu_custom_call.1} parent=0 // pred_fallthru
    _
  // Predicated region
  $region62: #{tpu_custom_call.1} parent=0 // pred_check
    _
  $region63: #{tpu_custom_call.1} parent=0 // pred_check_branch
    %2209 = sbr.rel (0) target = $region65
  $region64: #{tpu_custom_call.1} parent=0 // pred_region
    _
  $region65: #{tpu_custom_call.1} parent=0 // pred_fallthru
    _
  // Predicated region
  $region66: #{tpu_custom_call.1} parent=0 // pred_check
    _
  $region67: #{tpu_custom_call.1} parent=0 // pred_check_branch
    %2211 = sbr.rel (0) target = $region69
  $region68: #{tpu_custom_call.1} parent=0 // pred_region
    _
  $region69: #{tpu_custom_call.1} parent=0 // pred_fallthru
    _
  // Predicated region
  $region70: #{tpu_custom_call.1} parent=0 // pred_check
    _
  $region71: #{tpu_custom_call.1} parent=0 // pred_check_branch
    %2213 = sbr.rel (0) target = $region73
  $region72: #{tpu_custom_call.1} parent=0 // pred_region
    _
  $region73: #{tpu_custom_call.1} parent=0 // pred_fallthru
    _

</llo_original>
